<compile_context>
chip_gen: v5e
topology: v5e:2x2
jax: 0.10.0
libtpu: 0.0.40
codegen_flags: <defaults>
</compile_context>

<pallas_src>
import jax
import jax.numpy as jnp
from jax.experimental import pallas as pl
from jax.experimental.pallas import tpu as pltpu


# ----------------------------------------------------------------------------
# Pallas kernels
# ----------------------------------------------------------------------------
def _conv_relu_pool_kernel(w_ref, b_ref, p00_ref, p01_ref, p10_ref, p11_ref,
                           o_ref):
    """o = relu(max_{4 pool offsets}(w @ p_offset) + b).

    w:(Cout,K) bf16   p_*:(K,TM) bf16   b:(Cout,1) f32   o:(Cout,TM) bf16.
    MXU accumulates in f32; max(relu(x+b)) == relu(max(x)+b) (shared bias,
    monotone ReLU) so bias/ReLU are applied once after the 4-way max.
    """
    w = w_ref[...]
    d00 = jnp.dot(w, p00_ref[...], preferred_element_type=jnp.float32)
    d01 = jnp.dot(w, p01_ref[...], preferred_element_type=jnp.float32)
    d10 = jnp.dot(w, p10_ref[...], preferred_element_type=jnp.float32)
    d11 = jnp.dot(w, p11_ref[...], preferred_element_type=jnp.float32)
    m = jnp.maximum(jnp.maximum(d00, d01), jnp.maximum(d10, d11))
    o_ref[...] = jnp.maximum(m + b_ref[...], 0.0).astype(o_ref.dtype)


def _mlp_kernel(x_ref, w1_ref, b1_ref, w2_ref, b2_ref, w3_ref, b3_ref, o_ref):
    """Fused fc1(relu) -> fc2(relu) -> fc3, channel-major (features x batch).

    x:(400,TB) bf16, w_k native torch orientation (out,in) bf16, b_k (out,1)
    f32, o:(10,TB) f32.  Batch is on lanes -> lane-dense loads and stores.
    """
    h = jnp.dot(w1_ref[...], x_ref[...], preferred_element_type=jnp.float32)
    h = jnp.maximum(h + b1_ref[...], 0.0).astype(jnp.bfloat16)
    h = jnp.dot(w2_ref[...], h, preferred_element_type=jnp.float32)
    h = jnp.maximum(h + b2_ref[...], 0.0).astype(jnp.bfloat16)
    o_ref[...] = jnp.dot(w3_ref[...], h,
                         preferred_element_type=jnp.float32) + b3_ref[...]


# ----------------------------------------------------------------------------
# Tiling helper
# ----------------------------------------------------------------------------
def _pick_lane_tile(total, tile, split_threshold=512):
    """Largest lane tile <= `tile`.

    If the whole axis would otherwise be a single block but is reasonably
    large, split it into >=2 blocks (multiple of 128 lanes) so the 'parallel'
    1-D grid can shard across v7x's two TensorCores.
    """
    bm = min(tile, total)
    if bm == total and total >= split_threshold:
        half = (total + 1) // 2
        bm = ((half + 127) // 128) * 128
    return bm


# ----------------------------------------------------------------------------
# Wrappers around pallas_call
# ----------------------------------------------------------------------------
def conv_relu_pool(w, b, patches, *, tile_m=4096, allow_input_fusion=False):
    """Fused conv-as-GEMM + bias + ReLU + 2x2 max-pool.

    w: (Cout, K); b: (Cout,); patches: 4 arrays (K, M), one per pool offset,
    M = B*Po*Qo.  Returns pooled activation (Cout, M) in bf16.
    """
    Cout, K = w.shape
    M = patches[0].shape[1]
    bm = _pick_lane_tile(M, tile_m)
    grid = (pl.cdiv(M, bm),)

    w = w.astype(jnp.bfloat16)
    b2 = b.astype(jnp.float32).reshape(Cout, 1)
    patches = [p.astype(jnp.bfloat16) for p in patches]

    w_spec = pl.BlockSpec((Cout, K), lambda m: (0, 0))
    b_spec = pl.BlockSpec((Cout, 1), lambda m: (0, 0))
    p_spec = pl.BlockSpec((K, bm), lambda m: (0, m))
    o_spec = pl.BlockSpec((Cout, bm), lambda m: (0, m))

    cp_kwargs = dict(dimension_semantics=("parallel",))
    if allow_input_fusion:
        # Review experiment: let XLA fuse the strided-slice/stack im2col
        # producers into the patch-operand DMAs so the (K, M) buffers never
        # materialize in HBM.  Off by default (fusion support for
        # concatenate-style producers varies by compiler version).
        cp_kwargs["allow_input_fusion"] = [False, False, True, True, True, True]

    return pl.pallas_call(
        _conv_relu_pool_kernel,
        out_shape=jax.ShapeDtypeStruct((Cout, M), jnp.bfloat16),
        grid=grid,
        in_specs=[w_spec, b_spec, p_spec, p_spec, p_spec, p_spec],
        out_specs=o_spec,
        compiler_params=pltpu.CompilerParams(**cp_kwargs),
    )(w, b2, *patches)


def mlp3(x_cmaj, w1, b1, w2, b2, w3, b3, *, tile_b=1024):
    """Fused 3-layer MLP, channel-major.

    x_cmaj: (D0, B) features-by-batch; weights in native torch (out, in)
    orientation.  Returns logits channel-major (D3, B) in f32.
    """
    D0, B = x_cmaj.shape
    D1, D2, D3 = w1.shape[0], w2.shape[0], w3.shape[0]
    bb = _pick_lane_tile(B, tile_b)
    grid = (pl.cdiv(B, bb),)

    def const_spec(shape):
        return pl.BlockSpec(shape, lambda i: (0, 0))

    return pl.pallas_call(
        _mlp_kernel,
        out_shape=jax.ShapeDtypeStruct((D3, B), jnp.float32),
        grid=grid,
        in_specs=[
            pl.BlockSpec((D0, bb), lambda i: (0, i)),
            const_spec((D1, D0)), const_spec((D1, 1)),
            const_spec((D2, D1)), const_spec((D2, 1)),
            const_spec((D3, D2)), const_spec((D3, 1)),
        ],
        out_specs=pl.BlockSpec((D3, bb), lambda i: (0, i)),
        compiler_params=pltpu.CompilerParams(
            dimension_semantics=("parallel",)),
    )(x_cmaj.astype(jnp.bfloat16),
      w1.astype(jnp.bfloat16), b1.astype(jnp.float32).reshape(D1, 1),
      w2.astype(jnp.bfloat16), b2.astype(jnp.float32).reshape(D2, 1),
      w3.astype(jnp.bfloat16), b3.astype(jnp.float32).reshape(D3, 1))


# ----------------------------------------------------------------------------
# Patch-extraction glue (XLA strided slices; the GEMM+pool runs in Pallas)
# ----------------------------------------------------------------------------
def pooled_conv_patches(x_cmaj, kh, kw):
    """Four pool-offset im2col matrices for a 'valid' conv + 2x2/2 max-pool.

    x_cmaj: (C, B, H, W) channel-major activation (bf16).
    Returns ([p00, p01, p10, p11], Po, Qo); p_dd has shape (C*kh*kw, B*Po*Qo).
    Row order (c, i, j) matches torch weight.reshape(Cout, C*kh*kw);
    column order is (b, po, qo).
    """
    C, B, H, W = x_cmaj.shape
    Ho, Wo = H - kh + 1, W - kw + 1
    Po, Qo = Ho // 2, Wo // 2
    pats = []
    for dh in range(2):
        for dw in range(2):
            cols = []
            for i in range(kh):
                for j in range(kw):
                    r0, c0 = dh + i, dw + j
                    cols.append(
                        x_cmaj[:, :,
                               r0:r0 + 2 * Po - 1:2,
                               c0:c0 + 2 * Qo - 1:2])       # (C, B, Po, Qo)
            p = jnp.stack(cols, axis=1)                       # (C, kh*kw, B, Po, Qo)
            pats.append(p.reshape(C * kh * kw, B * Po * Qo))
    return pats, Po, Qo


# ----------------------------------------------------------------------------
# LeNet forward
# ----------------------------------------------------------------------------
def lenet_forward(x, params):
    """x: (B, 1, 28, 28) float32 -> logits (B, 10) float32."""
    B = x.shape[0]

    # conv1 (5x5, pad 2) + ReLU + 2x2 max-pool, one fused Pallas call (bf16).
    xc = jnp.transpose(x.astype(jnp.bfloat16), (1, 0, 2, 3))    # (1, B, 28, 28)
    xc = jnp.pad(xc, ((0, 0), (0, 0), (2, 2), (2, 2)))          # (1, B, 32, 32)
    pats, Po, Qo = pooled_conv_patches(xc, 5, 5)                # 4 x (25, B*196)
    y = conv_relu_pool(params["conv1_w"].reshape(6, 25),
                       params["conv1_b"], pats, tile_m=4096)    # (6, B*196) bf16
    y = y.reshape(6, B, Po, Qo)                                 # (6, B, 14, 14)

    # conv2 (5x5, valid) + ReLU + 2x2 max-pool; tile kept v5e-VMEM-safe.
    pats, Po, Qo = pooled_conv_patches(y, 5, 5)                 # 4 x (150, B*25)
    y = conv_relu_pool(params["conv2_w"].reshape(16, 150),
                       params["conv2_b"], pats, tile_m=1024)    # (16, B*25) bf16
    y = y.reshape(16, B, Po, Qo)                                # (16, B, 5, 5)

    # Channel-major flatten in torch (c, h, w) feature order -> (400, B); the
    # fused MLP emits lane-dense channel-major logits (10, B).
    flat = jnp.transpose(y, (0, 2, 3, 1)).reshape(16 * 5 * 5, B)   # (400, B)
    logits_t = mlp3(flat,
                    params["fc1_w"], params["fc1_b"],
                    params["fc2_w"], params["fc2_b"],
                    params["fc3_w"], params["fc3_b"])              # (10, B)
    return jnp.transpose(logits_t)                                 # (B, 10)


# ----------------------------------------------------------------------------
# Plain-XLA f32 reference (loose numerical cross-check vs bf16 kernels)
# ----------------------------------------------------------------------------
def lenet_reference(x, params):
    def conv(x, w, b, pad):
        y = jax.lax.conv_general_dilated(
            x, w, window_strides=(1, 1), padding=[(pad, pad), (pad, pad)],
            dimension_numbers=("NCHW", "OIHW", "NCHW"),
            precision=jax.lax.Precision.HIGHEST)
        return y + b.reshape(1, -1, 1, 1)

    def pool(x):
        B, C, H, W = x.shape
        return x.reshape(B, C, H // 2, 2, W // 2, 2).max(axis=(3, 5))

    y = pool(jax.nn.relu(conv(x, params["conv1_w"], params["conv1_b"], 2)))
    y = pool(jax.nn.relu(conv(y, params["conv2_w"], params["conv2_b"], 0)))
    y = y.reshape(x.shape[0], -1)
    y = jax.nn.relu(y @ params["fc1_w"].T + params["fc1_b"])
    y = jax.nn.relu(y @ params["fc2_w"].T + params["fc2_b"])
    return y @ params["fc3_w"].T + params["fc3_b"]


# ----------------------------------------------------------------------------
# Deterministic parameter init (PyTorch-style uniform(-1/sqrt(fan_in), +))
# ----------------------------------------------------------------------------
def init_params(key):
    def uniform(key, shape, fan_in):
        bound = 1.0 / jnp.sqrt(jnp.float32(fan_in))
        return jax.random.uniform(key, shape, jnp.float32, -bound, bound)

    ks = jax.random.split(key, 10)
    return {
        "conv1_w": uniform(ks[0], (6, 1, 5, 5), 1 * 5 * 5),
        "conv1_b": uniform(ks[1], (6,), 1 * 5 * 5),
        "conv2_w": uniform(ks[2], (16, 6, 5, 5), 6 * 5 * 5),
        "conv2_b": uniform(ks[3], (16,), 6 * 5 * 5),
        "fc1_w": uniform(ks[4], (120, 400), 400),
        "fc1_b": uniform(ks[5], (120,), 400),
        "fc2_w": uniform(ks[6], (84, 120), 120),
        "fc2_b": uniform(ks[7], (84,), 120),
        "fc3_w": uniform(ks[8], (10, 84), 84),
        "fc3_b": uniform(ks[9], (10,), 84),
    }


if __name__ == "__main__":
    key = jax.random.PRNGKey(0)
    k_param, k_x = jax.random.split(key)
    params = init_params(k_param)

    # MNIST-shaped input: batch=2, 1 channel, 28x28 (required so the conv/pool
    # stack yields the 16*5*5 = 400 features fc1 expects).
    x = jax.random.normal(k_x, (2, 1, 28, 28), dtype=jnp.float32)

    logits = jax.jit(lenet_forward)(x, params)
    logits = jax.block_until_ready(logits)
    assert logits.shape == (2, 10) and logits.dtype == jnp.float32

    # Cross-check against plain f32/HIGHEST XLA.  Tolerance is loose because
    # the Pallas path quantizes activations and weights to bf16 (f32 accum);
    # layout/order bugs would still produce O(logit-magnitude) errors.
    ref = jax.block_until_ready(jax.jit(lenet_reference)(x, params))
    assert bool(jnp.allclose(logits, ref, atol=1e-1, rtol=1e-1))

    print("KERNEL_OK")
</pallas_src>

<mosaic_0001>
module attributes {stable_mosaic.version = 11 : i64} {
  func.func @_conv_relu_pool_kernel(%arg0: i32, %arg1: memref<6x25xbf16, #tpu.memory_space<vmem>>, %arg2: memref<6x1xf32, #tpu.memory_space<vmem>>, %arg3: memref<25x392xbf16, #tpu.memory_space<vmem>>, %arg4: memref<25x392xbf16, #tpu.memory_space<vmem>>, %arg5: memref<25x392xbf16, #tpu.memory_space<vmem>>, %arg6: memref<25x392xbf16, #tpu.memory_space<vmem>>, %arg7: memref<6x392xbf16, #tpu.memory_space<vmem>>) attributes {dimension_semantics = [#tpu.dimension_semantics<parallel>], iteration_bounds = array<i64: 1>, scalar_prefetch = 0 : i64, scratch_operands = 0 : i64, tpu.core_type = #tpu.core_type<tc>, window_params = [{pipeline_mode = #tpu.pipeline_mode<synchronous>, transform_indices = @transform_0, window_bounds = array<i64: 6, 25>}, {pipeline_mode = #tpu.pipeline_mode<synchronous>, transform_indices = @transform_1, window_bounds = array<i64: 6, 1>}, {transform_indices = @transform_2, window_bounds = array<i64: 25, 392>}, {transform_indices = @transform_3, window_bounds = array<i64: 25, 392>}, {transform_indices = @transform_4, window_bounds = array<i64: 25, 392>}, {transform_indices = @transform_5, window_bounds = array<i64: 25, 392>}, {transform_indices = @transform_6, window_bounds = array<i64: 6, 392>}]} {
    %c0 = arith.constant 0 : index
    %c0_0 = arith.constant 0 : index
    %0 = vector.load %arg1[%c0, %c0_0] : memref<6x25xbf16, #tpu.memory_space<vmem>>, vector<6x25xbf16>
    %c0_1 = arith.constant 0 : index
    %c0_2 = arith.constant 0 : index
    %1 = vector.load %arg3[%c0_1, %c0_2] : memref<25x392xbf16, #tpu.memory_space<vmem>>, vector<25x392xbf16>
    %cst = arith.constant dense<0.000000e+00> : vector<6x392xf32>
    %2 = tpu.matmul %0, %1, %cst {dimension_numbers = #tpu.dot_dimension_numbers<[1], [0], [0], [1], [0, 0, 1, 1], [], []>} : vector<6x25xbf16>, vector<25x392xbf16>, vector<6x392xf32> -> vector<6x392xf32>
    %c0_3 = arith.constant 0 : index
    %c0_4 = arith.constant 0 : index
    %3 = vector.load %arg4[%c0_3, %c0_4] : memref<25x392xbf16, #tpu.memory_space<vmem>>, vector<25x392xbf16>
    %cst_5 = arith.constant dense<0.000000e+00> : vector<6x392xf32>
    %4 = tpu.matmul %0, %3, %cst_5 {dimension_numbers = #tpu.dot_dimension_numbers<[1], [0], [0], [1], [0, 0, 1, 1], [], []>} : vector<6x25xbf16>, vector<25x392xbf16>, vector<6x392xf32> -> vector<6x392xf32>
    %c0_6 = arith.constant 0 : index
    %c0_7 = arith.constant 0 : index
    %5 = vector.load %arg5[%c0_6, %c0_7] : memref<25x392xbf16, #tpu.memory_space<vmem>>, vector<25x392xbf16>
    %cst_8 = arith.constant dense<0.000000e+00> : vector<6x392xf32>
    %6 = tpu.matmul %0, %5, %cst_8 {dimension_numbers = #tpu.dot_dimension_numbers<[1], [0], [0], [1], [0, 0, 1, 1], [], []>} : vector<6x25xbf16>, vector<25x392xbf16>, vector<6x392xf32> -> vector<6x392xf32>
    %c0_9 = arith.constant 0 : index
    %c0_10 = arith.constant 0 : index
    %7 = vector.load %arg6[%c0_9, %c0_10] : memref<25x392xbf16, #tpu.memory_space<vmem>>, vector<25x392xbf16>
    %cst_11 = arith.constant dense<0.000000e+00> : vector<6x392xf32>
    %8 = tpu.matmul %0, %7, %cst_11 {dimension_numbers = #tpu.dot_dimension_numbers<[1], [0], [0], [1], [0, 0, 1, 1], [], []>} : vector<6x25xbf16>, vector<25x392xbf16>, vector<6x392xf32> -> vector<6x392xf32>
    %9 = arith.maximumf %2, %4 : vector<6x392xf32>
    %10 = arith.maximumf %6, %8 : vector<6x392xf32>
    %11 = arith.maximumf %9, %10 : vector<6x392xf32>
    %c0_12 = arith.constant 0 : index
    %c0_13 = arith.constant 0 : index
    %12 = vector.load %arg2[%c0_12, %c0_13] : memref<6x1xf32, #tpu.memory_space<vmem>>, vector<6x1xf32>
    %13 = vector.broadcast %12 : vector<6x1xf32> to vector<6x392xf32>
    %14 = arith.addf %11, %13 : vector<6x392xf32>
    %cst_14 = arith.constant 0.000000e+00 : f32
    %15 = vector.broadcast %cst_14 : f32 to vector<6x392xf32>
    %16 = arith.maximumf %14, %15 : vector<6x392xf32>
    %17 = arith.truncf %16 : vector<6x392xf32> to vector<6x392xbf16>
    %c0_15 = arith.constant 0 : index
    %c0_16 = arith.constant 0 : index
    %18 = vector.load %arg7[%c0_15, %c0_16] : memref<6x392xbf16, #tpu.memory_space<vmem>>, vector<6x392xbf16>
    tpu.vector_store %arg7[%c0_15, %c0_16], %17 {strides = array<i32>} : memref<6x392xbf16, #tpu.memory_space<vmem>>, vector<6x392xbf16>,
    return
  }
  func.func @transform_0(%arg0: i32) -> (i32, i32) {
    %c0_i32 = arith.constant 0 : i32
    %c0_i32_0 = arith.constant 0 : i32
    %c0_i32_1 = arith.constant 0 : i32
    return %c0_i32, %c0_i32_0 : i32, i32
  }
  func.func @transform_1(%arg0: i32) -> (i32, i32) {
    %c0_i32 = arith.constant 0 : i32
    %c0_i32_0 = arith.constant 0 : i32
    %c0_i32_1 = arith.constant 0 : i32
    return %c0_i32, %c0_i32_0 : i32, i32
  }
  func.func @transform_2(%arg0: i32) -> (i32, i32) {
    %c0_i32 = arith.constant 0 : i32
    %c0_i32_0 = arith.constant 0 : i32
    return %c0_i32, %arg0 : i32, i32
  }
  func.func @transform_3(%arg0: i32) -> (i32, i32) {
    %c0_i32 = arith.constant 0 : i32
    %c0_i32_0 = arith.constant 0 : i32
    return %c0_i32, %arg0 : i32, i32
  }
  func.func @transform_4(%arg0: i32) -> (i32, i32) {
    %c0_i32 = arith.constant 0 : i32
    %c0_i32_0 = arith.constant 0 : i32
    return %c0_i32, %arg0 : i32, i32
  }
  func.func @transform_5(%arg0: i32) -> (i32, i32) {
    %c0_i32 = arith.constant 0 : i32
    %c0_i32_0 = arith.constant 0 : i32
    return %c0_i32, %arg0 : i32, i32
  }
  func.func @transform_6(%arg0: i32) -> (i32, i32) {
    %c0_i32 = arith.constant 0 : i32
    %c0_i32_0 = arith.constant 0 : i32
    return %c0_i32, %arg0 : i32, i32
  }
}

module attributes {stable_mosaic.version = 11 : i64} {
  func.func @_conv_relu_pool_kernel(%arg0: i32, %arg1: memref<16x150xbf16, #tpu.memory_space<vmem>>, %arg2: memref<16x1xf32, #tpu.memory_space<vmem>>, %arg3: memref<150x50xbf16, #tpu.memory_space<vmem>>, %arg4: memref<150x50xbf16, #tpu.memory_space<vmem>>, %arg5: memref<150x50xbf16, #tpu.memory_space<vmem>>, %arg6: memref<150x50xbf16, #tpu.memory_space<vmem>>, %arg7: memref<16x50xbf16, #tpu.memory_space<vmem>>) attributes {dimension_semantics = [#tpu.dimension_semantics<parallel>], iteration_bounds = array<i64: 1>, scalar_prefetch = 0 : i64, scratch_operands = 0 : i64, tpu.core_type = #tpu.core_type<tc>, window_params = [{pipeline_mode = #tpu.pipeline_mode<synchronous>, transform_indices = @transform_0, window_bounds = array<i64: 16, 150>}, {pipeline_mode = #tpu.pipeline_mode<synchronous>, transform_indices = @transform_1, window_bounds = array<i64: 16, 1>}, {transform_indices = @transform_2, window_bounds = array<i64: 150, 50>}, {transform_indices = @transform_3, window_bounds = array<i64: 150, 50>}, {transform_indices = @transform_4, window_bounds = array<i64: 150, 50>}, {transform_indices = @transform_5, window_bounds = array<i64: 150, 50>}, {transform_indices = @transform_6, window_bounds = array<i64: 16, 50>}]} {
    %c0 = arith.constant 0 : index
    %c0_0 = arith.constant 0 : index
    %0 = vector.load %arg1[%c0, %c0_0] : memref<16x150xbf16, #tpu.memory_space<vmem>>, vector<16x150xbf16>
    %c0_1 = arith.constant 0 : index
    %c0_2 = arith.constant 0 : index
    %1 = vector.load %arg3[%c0_1, %c0_2] : memref<150x50xbf16, #tpu.memory_space<vmem>>, vector<150x50xbf16>
    %cst = arith.constant dense<0.000000e+00> : vector<16x50xf32>
    %2 = tpu.matmul %0, %1, %cst {dimension_numbers = #tpu.dot_dimension_numbers<[1], [0], [0], [1], [0, 0, 1, 1], [], []>} : vector<16x150xbf16>, vector<150x50xbf16>, vector<16x50xf32> -> vector<16x50xf32>
    %c0_3 = arith.constant 0 : index
    %c0_4 = arith.constant 0 : index
    %3 = vector.load %arg4[%c0_3, %c0_4] : memref<150x50xbf16, #tpu.memory_space<vmem>>, vector<150x50xbf16>
    %cst_5 = arith.constant dense<0.000000e+00> : vector<16x50xf32>
    %4 = tpu.matmul %0, %3, %cst_5 {dimension_numbers = #tpu.dot_dimension_numbers<[1], [0], [0], [1], [0, 0, 1, 1], [], []>} : vector<16x150xbf16>, vector<150x50xbf16>, vector<16x50xf32> -> vector<16x50xf32>
    %c0_6 = arith.constant 0 : index
    %c0_7 = arith.constant 0 : index
    %5 = vector.load %arg5[%c0_6, %c0_7] : memref<150x50xbf16, #tpu.memory_space<vmem>>, vector<150x50xbf16>
    %cst_8 = arith.constant dense<0.000000e+00> : vector<16x50xf32>
    %6 = tpu.matmul %0, %5, %cst_8 {dimension_numbers = #tpu.dot_dimension_numbers<[1], [0], [0], [1], [0, 0, 1, 1], [], []>} : vector<16x150xbf16>, vector<150x50xbf16>, vector<16x50xf32> -> vector<16x50xf32>
    %c0_9 = arith.constant 0 : index
    %c0_10 = arith.constant 0 : index
    %7 = vector.load %arg6[%c0_9, %c0_10] : memref<150x50xbf16, #tpu.memory_space<vmem>>, vector<150x50xbf16>
    %cst_11 = arith.constant dense<0.000000e+00> : vector<16x50xf32>
    %8 = tpu.matmul %0, %7, %cst_11 {dimension_numbers = #tpu.dot_dimension_numbers<[1], [0], [0], [1], [0, 0, 1, 1], [], []>} : vector<16x150xbf16>, vector<150x50xbf16>, vector<16x50xf32> -> vector<16x50xf32>
    %9 = arith.maximumf %2, %4 : vector<16x50xf32>
    %10 = arith.maximumf %6, %8 : vector<16x50xf32>
    %11 = arith.maximumf %9, %10 : vector<16x50xf32>
    %c0_12 = arith.constant 0 : index
    %c0_13 = arith.constant 0 : index
    %12 = vector.load %arg2[%c0_12, %c0_13] : memref<16x1xf32, #tpu.memory_space<vmem>>, vector<16x1xf32>
    %13 = vector.broadcast %12 : vector<16x1xf32> to vector<16x50xf32>
    %14 = arith.addf %11, %13 : vector<16x50xf32>
    %cst_14 = arith.constant 0.000000e+00 : f32
    %15 = vector.broadcast %cst_14 : f32 to vector<16x50xf32>
    %16 = arith.maximumf %14, %15 : vector<16x50xf32>
    %17 = arith.truncf %16 : vector<16x50xf32> to vector<16x50xbf16>
    %c0_15 = arith.constant 0 : index
    %c0_16 = arith.constant 0 : index
    %18 = vector.load %arg7[%c0_15, %c0_16] : memref<16x50xbf16, #tpu.memory_space<vmem>>, vector<16x50xbf16>
    tpu.vector_store %arg7[%c0_15, %c0_16], %17 {strides = array<i32>} : memref<16x50xbf16, #tpu.memory_space<vmem>>, vector<16x50xbf16>,
    return
  }
  func.func @transform_0(%arg0: i32) -> (i32, i32) {
    %c0_i32 = arith.constant 0 : i32
    %c0_i32_0 = arith.constant 0 : i32
    %c0_i32_1 = arith.constant 0 : i32
    return %c0_i32, %c0_i32_0 : i32, i32
  }
  func.func @transform_1(%arg0: i32) -> (i32, i32) {
    %c0_i32 = arith.constant 0 : i32
    %c0_i32_0 = arith.constant 0 : i32
    %c0_i32_1 = arith.constant 0 : i32
    return %c0_i32, %c0_i32_0 : i32, i32
  }
  func.func @transform_2(%arg0: i32) -> (i32, i32) {
    %c0_i32 = arith.constant 0 : i32
    %c0_i32_0 = arith.constant 0 : i32
    return %c0_i32, %arg0 : i32, i32
  }
  func.func @transform_3(%arg0: i32) -> (i32, i32) {
    %c0_i32 = arith.constant 0 : i32
    %c0_i32_0 = arith.constant 0 : i32
    return %c0_i32, %arg0 : i32, i32
  }
  func.func @transform_4(%arg0: i32) -> (i32, i32) {
    %c0_i32 = arith.constant 0 : i32
    %c0_i32_0 = arith.constant 0 : i32
    return %c0_i32, %arg0 : i32, i32
  }
  func.func @transform_5(%arg0: i32) -> (i32, i32) {
    %c0_i32 = arith.constant 0 : i32
    %c0_i32_0 = arith.constant 0 : i32
    return %c0_i32, %arg0 : i32, i32
  }
  func.func @transform_6(%arg0: i32) -> (i32, i32) {
    %c0_i32 = arith.constant 0 : i32
    %c0_i32_0 = arith.constant 0 : i32
    return %c0_i32, %arg0 : i32, i32
  }
}

module attributes {stable_mosaic.version = 11 : i64} {
  func.func @_mlp_kernel(%arg0: i32, %arg1: memref<400x2xbf16, #tpu.memory_space<vmem>>, %arg2: memref<120x400xbf16, #tpu.memory_space<vmem>>, %arg3: memref<120x1xf32, #tpu.memory_space<vmem>>, %arg4: memref<84x120xbf16, #tpu.memory_space<vmem>>, %arg5: memref<84x1xf32, #tpu.memory_space<vmem>>, %arg6: memref<10x84xbf16, #tpu.memory_space<vmem>>, %arg7: memref<10x1xf32, #tpu.memory_space<vmem>>, %arg8: memref<10x2xf32, #tpu.memory_space<vmem>>) attributes {dimension_semantics = [#tpu.dimension_semantics<parallel>], iteration_bounds = array<i64: 1>, scalar_prefetch = 0 : i64, scratch_operands = 0 : i64, tpu.core_type = #tpu.core_type<tc>, window_params = [{transform_indices = @transform_0, window_bounds = array<i64: 400, 2>}, {pipeline_mode = #tpu.pipeline_mode<synchronous>, transform_indices = @transform_1, window_bounds = array<i64: 120, 400>}, {pipeline_mode = #tpu.pipeline_mode<synchronous>, transform_indices = @transform_2, window_bounds = array<i64: 120, 1>}, {pipeline_mode = #tpu.pipeline_mode<synchronous>, transform_indices = @transform_3, window_bounds = array<i64: 84, 120>}, {pipeline_mode = #tpu.pipeline_mode<synchronous>, transform_indices = @transform_4, window_bounds = array<i64: 84, 1>}, {pipeline_mode = #tpu.pipeline_mode<synchronous>, transform_indices = @transform_5, window_bounds = array<i64: 10, 84>}, {pipeline_mode = #tpu.pipeline_mode<synchronous>, transform_indices = @transform_6, window_bounds = array<i64: 10, 1>}, {transform_indices = @transform_7, window_bounds = array<i64: 10, 2>}]} {
    %c0 = arith.constant 0 : index
    %c0_0 = arith.constant 0 : index
    %0 = vector.load %arg2[%c0, %c0_0] : memref<120x400xbf16, #tpu.memory_space<vmem>>, vector<120x400xbf16>
    %c0_1 = arith.constant 0 : index
    %c0_2 = arith.constant 0 : index
    %1 = vector.load %arg1[%c0_1, %c0_2] : memref<400x2xbf16, #tpu.memory_space<vmem>>, vector<400x2xbf16>
    %cst = arith.constant dense<0.000000e+00> : vector<120x2xf32>
    %2 = tpu.matmul %0, %1, %cst {dimension_numbers = #tpu.dot_dimension_numbers<[1], [0], [0], [1], [0, 0, 1, 1], [], []>} : vector<120x400xbf16>, vector<400x2xbf16>, vector<120x2xf32> -> vector<120x2xf32>
    %c0_3 = arith.constant 0 : index
    %c0_4 = arith.constant 0 : index
    %3 = vector.load %arg3[%c0_3, %c0_4] : memref<120x1xf32, #tpu.memory_space<vmem>>, vector<120x1xf32>
    %4 = vector.broadcast %3 : vector<120x1xf32> to vector<120x2xf32>
    %5 = arith.addf %2, %4 : vector<120x2xf32>
    %cst_5 = arith.constant 0.000000e+00 : f32
    %6 = vector.broadcast %cst_5 : f32 to vector<120x2xf32>
    %7 = arith.maximumf %5, %6 : vector<120x2xf32>
    %8 = arith.truncf %7 : vector<120x2xf32> to vector<120x2xbf16>
    %c0_6 = arith.constant 0 : index
    %c0_7 = arith.constant 0 : index
    %9 = vector.load %arg4[%c0_6, %c0_7] : memref<84x120xbf16, #tpu.memory_space<vmem>>, vector<84x120xbf16>
    %cst_8 = arith.constant dense<0.000000e+00> : vector<84x2xf32>
    %10 = tpu.matmul %9, %8, %cst_8 {dimension_numbers = #tpu.dot_dimension_numbers<[1], [0], [0], [1], [0, 0, 1, 1], [], []>} : vector<84x120xbf16>, vector<120x2xbf16>, vector<84x2xf32> -> vector<84x2xf32>
    %c0_9 = arith.constant 0 : index
    %c0_10 = arith.constant 0 : index
    %11 = vector.load %arg5[%c0_9, %c0_10] : memref<84x1xf32, #tpu.memory_space<vmem>>, vector<84x1xf32>
    %12 = vector.broadcast %11 : vector<84x1xf32> to vector<84x2xf32>
    %13 = arith.addf %10, %12 : vector<84x2xf32>
    %cst_11 = arith.constant 0.000000e+00 : f32
    %14 = vector.broadcast %cst_11 : f32 to vector<84x2xf32>
    %15 = arith.maximumf %13, %14 : vector<84x2xf32>
    %16 = arith.truncf %15 : vector<84x2xf32> to vector<84x2xbf16>
    %c0_12 = arith.constant 0 : index
    %c0_13 = arith.constant 0 : index
    %17 = vector.load %arg6[%c0_12, %c0_13] : memref<10x84xbf16, #tpu.memory_space<vmem>>, vector<10x84xbf16>
    %cst_14 = arith.constant dense<0.000000e+00> : vector<10x2xf32>
    %18 = tpu.matmul %17, %16, %cst_14 {dimension_numbers = #tpu.dot_dimension_numbers<[1], [0], [0], [1], [0, 0, 1, 1], [], []>} : vector<10x84xbf16>, vector<84x2xbf16>, vector<10x2xf32> -> vector<10x2xf32>
    %c0_15 = arith.constant 0 : index
    %c0_16 = arith.constant 0 : index
    %19 = vector.load %arg7[%c0_15, %c0_16] : memref<10x1xf32, #tpu.memory_space<vmem>>, vector<10x1xf32>
    %20 = vector.broadcast %19 : vector<10x1xf32> to vector<10x2xf32>
    %21 = arith.addf %18, %20 : vector<10x2xf32>
    %c0_17 = arith.constant 0 : index
    %c0_18 = arith.constant 0 : index
    %22 = vector.load %arg8[%c0_17, %c0_18] : memref<10x2xf32, #tpu.memory_space<vmem>>, vector<10x2xf32>
    tpu.vector_store %arg8[%c0_17, %c0_18], %21 {strides = array<i32>} : memref<10x2xf32, #tpu.memory_space<vmem>>, vector<10x2xf32>,
    return
  }
  func.func @transform_0(%arg0: i32) -> (i32, i32) {
    %c0_i32 = arith.constant 0 : i32
    %c0_i32_0 = arith.constant 0 : i32
    return %c0_i32, %arg0 : i32, i32
  }
  func.func @transform_1(%arg0: i32) -> (i32, i32) {
    %c0_i32 = arith.constant 0 : i32
    %c0_i32_0 = arith.constant 0 : i32
    %c0_i32_1 = arith.constant 0 : i32
    return %c0_i32, %c0_i32_0 : i32, i32
  }
  func.func @transform_2(%arg0: i32) -> (i32, i32) {
    %c0_i32 = arith.constant 0 : i32
    %c0_i32_0 = arith.constant 0 : i32
    %c0_i32_1 = arith.constant 0 : i32
    return %c0_i32, %c0_i32_0 : i32, i32
  }
  func.func @transform_3(%arg0: i32) -> (i32, i32) {
    %c0_i32 = arith.constant 0 : i32
    %c0_i32_0 = arith.constant 0 : i32
    %c0_i32_1 = arith.constant 0 : i32
    return %c0_i32, %c0_i32_0 : i32, i32
  }
  func.func @transform_4(%arg0: i32) -> (i32, i32) {
    %c0_i32 = arith.constant 0 : i32
    %c0_i32_0 = arith.constant 0 : i32
    %c0_i32_1 = arith.constant 0 : i32
    return %c0_i32, %c0_i32_0 : i32, i32
  }
  func.func @transform_5(%arg0: i32) -> (i32, i32) {
    %c0_i32 = arith.constant 0 : i32
    %c0_i32_0 = arith.constant 0 : i32
    %c0_i32_1 = arith.constant 0 : i32
    return %c0_i32, %c0_i32_0 : i32, i32
  }
  func.func @transform_6(%arg0: i32) -> (i32, i32) {
    %c0_i32 = arith.constant 0 : i32
    %c0_i32_0 = arith.constant 0 : i32
    %c0_i32_1 = arith.constant 0 : i32
    return %c0_i32, %c0_i32_0 : i32, i32
  }
  func.func @transform_7(%arg0: i32) -> (i32, i32) {
    %c0_i32 = arith.constant 0 : i32
    %c0_i32_0 = arith.constant 0 : i32
    return %c0_i32, %arg0 : i32, i32
  }
}

</mosaic_0001>

<llo_original>
// kernel: lenet_forward.3
$region0: #{lenet_forward.3}
  #allocation0 [shape = 'u32[]', space=smem, size = 0x4, offset = 0x4, fixed_abs, tag = 'smem constant byte address 0x4 - core index']
  #allocation1 [shape = 'u32[72,128]{1,0:T(1,128)}', space=vmem, size = 0x9000, scoped, tag = 'internal scratch']
  %s0 = inlined_call_operand.vmem [shape: bf16[6,25], index: 0, kind: input, shape index: {}]
  %s1 = inlined_call_operand.vmem [shape: f32[6,1], index: 1, kind: input, shape index: {}]
  %s2 = inlined_call_operand.vmem [shape: bf16[25,392], index: 2, kind: input, shape index: {}]
  %s3 = inlined_call_operand.vmem [shape: bf16[25,392], index: 3, kind: input, shape index: {}]
  %s4 = inlined_call_operand.vmem [shape: bf16[25,392], index: 4, kind: input, shape index: {}]
  %s5 = inlined_call_operand.vmem [shape: bf16[25,392], index: 5, kind: input, shape index: {}]
  %s6 = inlined_call_operand.vmem [shape: bf16[6,392], index: 6, kind: output, shape index: {}]
  %s7 = sld [smem:[#allocation0]]
  $region34: #{lenet_forward.3} parent=0
    _
  %s9 = ssub.s32 1, %s7
  %s10 = scalar_select 0, %s9, %s7
  // Predicated region
  $region2: #{lenet_forward.3} parent=0 // pred_check
    _
  $region3: #{lenet_forward.3} parent=0 // pred_check_branch
    %12 = sbr.rel (0) target = $region5
  $region4: #{lenet_forward.3} parent=0 // pred_region
    _
  $region5: #{lenet_forward.3} parent=0 // pred_fallthru
    _
  // Predicated region
  $region6: #{lenet_forward.3} parent=0 // pred_check
    _
  $region7: #{lenet_forward.3} parent=0 // pred_check_branch
    %14 = sbr.rel (0) target = $region9
  $region8: #{lenet_forward.3} parent=0 // pred_region
    _
  $region9: #{lenet_forward.3} parent=0 // pred_fallthru
    _
  // Predicated region
  $region10: #{lenet_forward.3} parent=0 // pred_check
    _
  $region11: #{lenet_forward.3} parent=0 // pred_check_branch
    %16 = sbr.rel (0) target = $region13
  $region12: #{lenet_forward.3} parent=0 // pred_region
    _
  $region13: #{lenet_forward.3} parent=0 // pred_fallthru
    _
  // Predicated region
  $region14: #{lenet_forward.3} parent=0 // pred_check
    _
  $region15: #{lenet_forward.3} parent=0 // pred_check_branch
    %18 = sbr.rel (0) target = $region17
  $region16: #{lenet_forward.3} parent=0 // pred_region
    _
  $region17: #{lenet_forward.3} parent=0 // pred_fallthru
    _
  // Predicated region
  $region18: #{lenet_forward.3} parent=0 // pred_check
    _
  $region19: #{lenet_forward.3} parent=0 // pred_check_branch
    %20 = sbr.rel (0) target = $region21
  $region20: #{lenet_forward.3} parent=0 // pred_region
    _
  $region21: #{lenet_forward.3} parent=0 // pred_fallthru
    _
  // Predicated region
  $region22: #{lenet_forward.3} parent=0 // pred_check
    _
  $region23: #{lenet_forward.3} parent=0 // pred_check_branch
    %22 = sbr.rel (0) target = $region25
  $region24: #{lenet_forward.3} parent=0 // pred_region
    _
  $region25: #{lenet_forward.3} parent=0 // pred_fallthru
    _
  %v24 = vld [vmem:[%s0] sm:$0x7]
  %v25 = vld [vmem:[%s2] sm:$0xff]
  %v26 = vld [vmem:[%s2 + $0x8] sm:$0xff]
  %v27 = vld [vmem:[%s2 + $0x10] sm:$0xff]
  %v28 = vld [vmem:[%s2 + $0x18] sm:$0xff]
  %v29 = vld [vmem:[%s2 + $0x20] sm:$0xff]
  %v30 = vld [vmem:[%s2 + $0x28] sm:$0xff]
  %v31 = vld [vmem:[%s2 + $0x30] sm:$0x11]
  %v32 = vld [vmem:[%s2 + $0x38] sm:$0x11]
  %v41 = vunpack.c.l.b16 %v25
  %v42 = vunpack.c.h.b16 %v25
  %v43 = vunpack.c.l.b16 %v26
  %v44 = vunpack.c.h.b16 %v26
  %v45 = vunpack.c.l.b16 %v27
  %v46 = vunpack.c.h.b16 %v27
  %v47 = vunpack.c.l.b16 %v28
  %v48 = vunpack.c.h.b16 %v28
  %v49 = vunpack.c.l.b16 %v29
  %v50 = vunpack.c.h.b16 %v29
  %v51 = vunpack.c.l.b16 %v30
  %v52 = vunpack.c.h.b16 %v30
  %v53 = vunpack.c.l.b16 %v31
  %v54 = vunpack.c.h.b16 %v31
  %v55 = vunpack.c.l.b16 %v32
  %v56 = vunpack.c.h.b16 %v32
  %v57 = vpack.c.b16 %v45, %v41
  %v58 = vpack.c.b16 %v46, %v42
  %v59 = vpack.c.b16 %v47, %v43
  %v60 = vpack.c.b16 %v48, %v44
  %v61 = vpack.c.b16 %v53, %v49
  %v62 = vpack.c.b16 %v54, %v50
  %v63 = vpack.c.b16 %v55, %v51
  %v64 = vpack.c.b16 %v56, %v52
  %vm69 = vcmask 203776
  %v71 = vsel %vm69, %v24, 0
  %vm73 = vcmask 1043456
  %vm74 = vcmask 1044480
  %v75 = vsel %vm73, 4294967295, 65535
  %v76 = vsel %vm74, %v75, 0
  %v78 = vand.u32 %v61, %v76
  %v81 = vand.u32 %v62, %v76
  %v84 = vand.u32 %v63, %v76
  %v87 = vand.u32 %v64, %v76
  %89 = vmatpush.bf16.msra.mxu0 0
  %90 = vmatpush.bf16.msra.mxu0 0
  %91 = vmatpush.bf16.msra.mxu0 0
  %92 = vmatpush.bf16.msra.mxu0 0
  %93 = vmatpush.bf16.msra.mxu0 0
  %94 = vmatpush.bf16.msra.mxu0 0
  %95 = vmatpush.bf16.msra.mxu0 %v78
  %96 = vmatpush.bf16.msra.mxu0 %v57
  %97 = vmatmul.bf16.gmra.mxu0 %v71
  %v98 = vpop.f32.mrf.mxu0
  %v99 = vadd.f32 0.0, %v98
  %v100 = vpop.f32.mrf.mxu0
  %101 = vdwg.mxu0
  %102 = vmatpush.bf16.msra.mxu0 0
  %103 = vmatpush.bf16.msra.mxu0 0
  %104 = vmatpush.bf16.msra.mxu0 0
  %105 = vmatpush.bf16.msra.mxu0 0
  %106 = vmatpush.bf16.msra.mxu0 0
  %107 = vmatpush.bf16.msra.mxu0 0
  %108 = vmatpush.bf16.msra.mxu0 %v81
  %109 = vmatpush.bf16.msra.mxu0 %v58
  %110 = vmatmul.bf16.gmra.mxu0 %v71
  %v111 = vpop.f32.mrf.mxu0
  %v112 = vadd.f32 0.0, %v111
  %v113 = vpop.f32.mrf.mxu0
  %114 = vdwg.mxu0
  %115 = vmatpush.bf16.msra.mxu0 0
  %116 = vmatpush.bf16.msra.mxu0 0
  %117 = vmatpush.bf16.msra.mxu0 0
  %118 = vmatpush.bf16.msra.mxu0 0
  %119 = vmatpush.bf16.msra.mxu0 0
  %120 = vmatpush.bf16.msra.mxu0 0
  %121 = vmatpush.bf16.msra.mxu0 %v84
  %122 = vmatpush.bf16.msra.mxu0 %v59
  %123 = vmatmul.bf16.gmra.mxu0 %v71
  %v124 = vpop.f32.mrf.mxu0
  %v125 = vadd.f32 0.0, %v124
  %v126 = vpop.f32.mrf.mxu0
  %127 = vdwg.mxu0
  %128 = vmatpush.bf16.msra.mxu0 0
  %129 = vmatpush.bf16.msra.mxu0 0
  %130 = vmatpush.bf16.msra.mxu0 0
  %131 = vmatpush.bf16.msra.mxu0 0
  %132 = vmatpush.bf16.msra.mxu0 0
  %133 = vmatpush.bf16.msra.mxu0 0
  %134 = vmatpush.bf16.msra.mxu0 %v87
  %135 = vmatpush.bf16.msra.mxu0 %v60
  %136 = vmatmul.bf16.gmra.mxu0 %v71
  %v137 = vpop.f32.mrf.mxu0
  %v138 = vadd.f32 0.0, %v137
  %v139 = vpop.f32.mrf.mxu0
  %140 = vdwg.mxu0
  %v141 = vld [vmem:[%s3] sm:$0xff]
  %v142 = vld [vmem:[%s3 + $0x8] sm:$0xff]
  %v143 = vld [vmem:[%s3 + $0x10] sm:$0xff]
  %v144 = vld [vmem:[%s3 + $0x18] sm:$0xff]
  %v145 = vld [vmem:[%s3 + $0x20] sm:$0xff]
  %v146 = vld [vmem:[%s3 + $0x28] sm:$0xff]
  %v147 = vld [vmem:[%s3 + $0x30] sm:$0x11]
  %v148 = vld [vmem:[%s3 + $0x38] sm:$0x11]
  %v157 = vunpack.c.l.b16 %v141
  %v158 = vunpack.c.h.b16 %v141
  %v159 = vunpack.c.l.b16 %v142
  %v160 = vunpack.c.h.b16 %v142
  %v161 = vunpack.c.l.b16 %v143
  %v162 = vunpack.c.h.b16 %v143
  %v163 = vunpack.c.l.b16 %v144
  %v164 = vunpack.c.h.b16 %v144
  %v165 = vunpack.c.l.b16 %v145
  %v166 = vunpack.c.h.b16 %v145
  %v167 = vunpack.c.l.b16 %v146
  %v168 = vunpack.c.h.b16 %v146
  %v169 = vunpack.c.l.b16 %v147
  %v170 = vunpack.c.h.b16 %v147
  %v171 = vunpack.c.l.b16 %v148
  %v172 = vunpack.c.h.b16 %v148
  %v173 = vpack.c.b16 %v161, %v157
  %v174 = vpack.c.b16 %v162, %v158
  %v175 = vpack.c.b16 %v163, %v159
  %v176 = vpack.c.b16 %v164, %v160
  %v177 = vpack.c.b16 %v169, %v165
  %v178 = vpack.c.b16 %v170, %v166
  %v179 = vpack.c.b16 %v171, %v167
  %v180 = vpack.c.b16 %v172, %v168
  %v186 = vand.u32 %v177, %v76
  %v189 = vand.u32 %v178, %v76
  %v192 = vand.u32 %v179, %v76
  %v195 = vand.u32 %v180, %v76
  %197 = vmatpush.bf16.msra.mxu0 0
  %198 = vmatpush.bf16.msra.mxu0 0
  %199 = vmatpush.bf16.msra.mxu0 0
  %200 = vmatpush.bf16.msra.mxu0 0
  %201 = vmatpush.bf16.msra.mxu0 0
  %202 = vmatpush.bf16.msra.mxu0 0
  %203 = vmatpush.bf16.msra.mxu0 %v186
  %204 = vmatpush.bf16.msra.mxu0 %v173
  %205 = vmatmul.bf16.gmra.mxu0 %v71
  %v206 = vpop.f32.mrf.mxu0
  %v207 = vadd.f32 0.0, %v206
  %v208 = vpop.f32.mrf.mxu0
  %209 = vdwg.mxu0
  %210 = vmatpush.bf16.msra.mxu0 0
  %211 = vmatpush.bf16.msra.mxu0 0
  %212 = vmatpush.bf16.msra.mxu0 0
  %213 = vmatpush.bf16.msra.mxu0 0
  %214 = vmatpush.bf16.msra.mxu0 0
  %215 = vmatpush.bf16.msra.mxu0 0
  %216 = vmatpush.bf16.msra.mxu0 %v189
  %217 = vmatpush.bf16.msra.mxu0 %v174
  %218 = vmatmul.bf16.gmra.mxu0 %v71
  %v219 = vpop.f32.mrf.mxu0
  %v220 = vadd.f32 0.0, %v219
  %v221 = vpop.f32.mrf.mxu0
  %222 = vdwg.mxu0
  %223 = vmatpush.bf16.msra.mxu0 0
  %224 = vmatpush.bf16.msra.mxu0 0
  %225 = vmatpush.bf16.msra.mxu0 0
  %226 = vmatpush.bf16.msra.mxu0 0
  %227 = vmatpush.bf16.msra.mxu0 0
  %228 = vmatpush.bf16.msra.mxu0 0
  %229 = vmatpush.bf16.msra.mxu0 %v192
  %230 = vmatpush.bf16.msra.mxu0 %v175
  %231 = vmatmul.bf16.gmra.mxu0 %v71
  %v232 = vpop.f32.mrf.mxu0
  %v233 = vadd.f32 0.0, %v232
  %v234 = vpop.f32.mrf.mxu0
  %235 = vdwg.mxu0
  %236 = vmatpush.bf16.msra.mxu0 0
  %237 = vmatpush.bf16.msra.mxu0 0
  %238 = vmatpush.bf16.msra.mxu0 0
  %239 = vmatpush.bf16.msra.mxu0 0
  %240 = vmatpush.bf16.msra.mxu0 0
  %241 = vmatpush.bf16.msra.mxu0 0
  %242 = vmatpush.bf16.msra.mxu0 %v195
  %243 = vmatpush.bf16.msra.mxu0 %v176
  %244 = vmatmul.bf16.gmra.mxu0 %v71
  %v245 = vpop.f32.mrf.mxu0
  %v246 = vadd.f32 0.0, %v245
  %v247 = vpop.f32.mrf.mxu0
  %248 = vdwg.mxu0
  %v249 = vld [vmem:[%s4] sm:$0xff]
  %v250 = vld [vmem:[%s4 + $0x8] sm:$0xff]
  %v251 = vld [vmem:[%s4 + $0x10] sm:$0xff]
  %v252 = vld [vmem:[%s4 + $0x18] sm:$0xff]
  %v253 = vld [vmem:[%s4 + $0x20] sm:$0xff]
  %v254 = vld [vmem:[%s4 + $0x28] sm:$0xff]
  %v255 = vld [vmem:[%s4 + $0x30] sm:$0x11]
  %v256 = vld [vmem:[%s4 + $0x38] sm:$0x11]
  %v265 = vunpack.c.l.b16 %v249
  %v266 = vunpack.c.h.b16 %v249
  %v267 = vunpack.c.l.b16 %v250
  %v268 = vunpack.c.h.b16 %v250
  %v269 = vunpack.c.l.b16 %v251
  %v270 = vunpack.c.h.b16 %v251
  %v271 = vunpack.c.l.b16 %v252
  %v272 = vunpack.c.h.b16 %v252
  %v273 = vunpack.c.l.b16 %v253
  %v274 = vunpack.c.h.b16 %v253
  %v275 = vunpack.c.l.b16 %v254
  %v276 = vunpack.c.h.b16 %v254
  %v277 = vunpack.c.l.b16 %v255
  %v278 = vunpack.c.h.b16 %v255
  %v279 = vunpack.c.l.b16 %v256
  %v280 = vunpack.c.h.b16 %v256
  %v281 = vpack.c.b16 %v269, %v265
  %v282 = vpack.c.b16 %v270, %v266
  %v283 = vpack.c.b16 %v271, %v267
  %v284 = vpack.c.b16 %v272, %v268
  %v285 = vpack.c.b16 %v277, %v273
  %v286 = vpack.c.b16 %v278, %v274
  %v287 = vpack.c.b16 %v279, %v275
  %v288 = vpack.c.b16 %v280, %v276
  %v294 = vand.u32 %v285, %v76
  %v297 = vand.u32 %v286, %v76
  %v300 = vand.u32 %v287, %v76
  %v303 = vand.u32 %v288, %v76
  %305 = vmatpush.bf16.msra.mxu0 0
  %306 = vmatpush.bf16.msra.mxu0 0
  %307 = vmatpush.bf16.msra.mxu0 0
  %308 = vmatpush.bf16.msra.mxu0 0
  %309 = vmatpush.bf16.msra.mxu0 0
  %310 = vmatpush.bf16.msra.mxu0 0
  %311 = vmatpush.bf16.msra.mxu0 %v294
  %312 = vmatpush.bf16.msra.mxu0 %v281
  %313 = vmatmul.bf16.gmra.mxu0 %v71
  %v314 = vpop.f32.mrf.mxu0
  %v315 = vadd.f32 0.0, %v314
  %v316 = vpop.f32.mrf.mxu0
  %317 = vdwg.mxu0
  %318 = vmatpush.bf16.msra.mxu0 0
  %319 = vmatpush.bf16.msra.mxu0 0
  %320 = vmatpush.bf16.msra.mxu0 0
  %321 = vmatpush.bf16.msra.mxu0 0
  %322 = vmatpush.bf16.msra.mxu0 0
  %323 = vmatpush.bf16.msra.mxu0 0
  %324 = vmatpush.bf16.msra.mxu0 %v297
  %325 = vmatpush.bf16.msra.mxu0 %v282
  %326 = vmatmul.bf16.gmra.mxu0 %v71
  %v327 = vpop.f32.mrf.mxu0
  %v328 = vadd.f32 0.0, %v327
  %v329 = vpop.f32.mrf.mxu0
  %330 = vdwg.mxu0
  %331 = vmatpush.bf16.msra.mxu0 0
  %332 = vmatpush.bf16.msra.mxu0 0
  %333 = vmatpush.bf16.msra.mxu0 0
  %334 = vmatpush.bf16.msra.mxu0 0
  %335 = vmatpush.bf16.msra.mxu0 0
  %336 = vmatpush.bf16.msra.mxu0 0
  %337 = vmatpush.bf16.msra.mxu0 %v300
  %338 = vmatpush.bf16.msra.mxu0 %v283
  %339 = vmatmul.bf16.gmra.mxu0 %v71
  %v340 = vpop.f32.mrf.mxu0
  %v341 = vadd.f32 0.0, %v340
  %v342 = vpop.f32.mrf.mxu0
  %343 = vdwg.mxu0
  %344 = vmatpush.bf16.msra.mxu0 0
  %345 = vmatpush.bf16.msra.mxu0 0
  %346 = vmatpush.bf16.msra.mxu0 0
  %347 = vmatpush.bf16.msra.mxu0 0
  %348 = vmatpush.bf16.msra.mxu0 0
  %349 = vmatpush.bf16.msra.mxu0 0
  %350 = vmatpush.bf16.msra.mxu0 %v303
  %351 = vmatpush.bf16.msra.mxu0 %v284
  %352 = vmatmul.bf16.gmra.mxu0 %v71
  %v353 = vpop.f32.mrf.mxu0
  %v354 = vadd.f32 0.0, %v353
  %v355 = vpop.f32.mrf.mxu0
  %356 = vdwg.mxu0
  %v357 = vld [vmem:[%s5] sm:$0xff]
  %v358 = vld [vmem:[%s5 + $0x8] sm:$0xff]
  %v359 = vld [vmem:[%s5 + $0x10] sm:$0xff]
  %v360 = vld [vmem:[%s5 + $0x18] sm:$0xff]
  %v361 = vld [vmem:[%s5 + $0x20] sm:$0xff]
  %v362 = vld [vmem:[%s5 + $0x28] sm:$0xff]
  %v363 = vld [vmem:[%s5 + $0x30] sm:$0x11]
  %v364 = vld [vmem:[%s5 + $0x38] sm:$0x11]
  %v373 = vunpack.c.l.b16 %v357
  %v374 = vunpack.c.h.b16 %v357
  %v375 = vunpack.c.l.b16 %v358
  %v376 = vunpack.c.h.b16 %v358
  %v377 = vunpack.c.l.b16 %v359
  %v378 = vunpack.c.h.b16 %v359
  %v379 = vunpack.c.l.b16 %v360
  %v380 = vunpack.c.h.b16 %v360
  %v381 = vunpack.c.l.b16 %v361
  %v382 = vunpack.c.h.b16 %v361
  %v383 = vunpack.c.l.b16 %v362
  %v384 = vunpack.c.h.b16 %v362
  %v385 = vunpack.c.l.b16 %v363
  %v386 = vunpack.c.h.b16 %v363
  %v387 = vunpack.c.l.b16 %v364
  %v388 = vunpack.c.h.b16 %v364
  %v389 = vpack.c.b16 %v377, %v373
  %v390 = vpack.c.b16 %v378, %v374
  %v391 = vpack.c.b16 %v379, %v375
  %v392 = vpack.c.b16 %v380, %v376
  %v393 = vpack.c.b16 %v385, %v381
  %v394 = vpack.c.b16 %v386, %v382
  %v395 = vpack.c.b16 %v387, %v383
  %v396 = vpack.c.b16 %v388, %v384
  %v402 = vand.u32 %v393, %v76
  %v405 = vand.u32 %v394, %v76
  %v408 = vand.u32 %v395, %v76
  %v411 = vand.u32 %v396, %v76
  %413 = vmatpush.bf16.msra.mxu0 0
  %414 = vmatpush.bf16.msra.mxu0 0
  %415 = vmatpush.bf16.msra.mxu0 0
  %416 = vmatpush.bf16.msra.mxu0 0
  %417 = vmatpush.bf16.msra.mxu0 0
  %418 = vmatpush.bf16.msra.mxu0 0
  %419 = vmatpush.bf16.msra.mxu0 %v402
  %420 = vmatpush.bf16.msra.mxu0 %v389
  %421 = vmatmul.bf16.gmra.mxu0 %v71
  %v422 = vpop.f32.mrf.mxu0
  %v423 = vadd.f32 0.0, %v422
  %v424 = vpop.f32.mrf.mxu0
  %425 = vdwg.mxu0
  %426 = vmatpush.bf16.msra.mxu0 0
  %427 = vmatpush.bf16.msra.mxu0 0
  %428 = vmatpush.bf16.msra.mxu0 0
  %429 = vmatpush.bf16.msra.mxu0 0
  %430 = vmatpush.bf16.msra.mxu0 0
  %431 = vmatpush.bf16.msra.mxu0 0
  %432 = vmatpush.bf16.msra.mxu0 %v405
  %433 = vmatpush.bf16.msra.mxu0 %v390
  %434 = vmatmul.bf16.gmra.mxu0 %v71
  %v435 = vpop.f32.mrf.mxu0
  %v436 = vadd.f32 0.0, %v435
  %v437 = vpop.f32.mrf.mxu0
  %438 = vdwg.mxu0
  %439 = vmatpush.bf16.msra.mxu0 0
  %440 = vmatpush.bf16.msra.mxu0 0
  %441 = vmatpush.bf16.msra.mxu0 0
  %442 = vmatpush.bf16.msra.mxu0 0
  %443 = vmatpush.bf16.msra.mxu0 0
  %444 = vmatpush.bf16.msra.mxu0 0
  %445 = vmatpush.bf16.msra.mxu0 %v408
  %446 = vmatpush.bf16.msra.mxu0 %v391
  %447 = vmatmul.bf16.gmra.mxu0 %v71
  %v448 = vpop.f32.mrf.mxu0
  %v449 = vadd.f32 0.0, %v448
  %v450 = vpop.f32.mrf.mxu0
  %451 = vdwg.mxu0
  %452 = vmatpush.bf16.msra.mxu0 0
  %453 = vmatpush.bf16.msra.mxu0 0
  %454 = vmatpush.bf16.msra.mxu0 0
  %455 = vmatpush.bf16.msra.mxu0 0
  %456 = vmatpush.bf16.msra.mxu0 0
  %457 = vmatpush.bf16.msra.mxu0 0
  %458 = vmatpush.bf16.msra.mxu0 %v411
  %459 = vmatpush.bf16.msra.mxu0 %v392
  %460 = vmatmul.bf16.gmra.mxu0 %v71
  %v461 = vpop.f32.mrf.mxu0
  %v462 = vadd.f32 0.0, %v461
  %v463 = vpop.f32.mrf.mxu0
  %464 = vdwg.mxu0
  %v465 = vmax.f32 %v99, %v207
  %v466 = vmax.f32 %v112, %v220
  %v467 = vmax.f32 %v125, %v233
  %v468 = vmax.f32 %v138, %v246
  %v469 = vmax.f32 %v315, %v423
  %v470 = vmax.f32 %v328, %v436
  %v471 = vmax.f32 %v341, %v449
  %v472 = vmax.f32 %v354, %v462
  %v473 = vmax.f32 %v465, %v469
  %v474 = vmax.f32 %v466, %v470
  %v475 = vmax.f32 %v467, %v471
  %v476 = vmax.f32 %v468, %v472
  %v477 = vld [vmem:[%s1] sm:$0x3f]
  %479 = vset.pattern.permute.xlu0 0
  %480 = vperm.xlu0 %479, %v477
  %v481 = vpop.permute.xlu0 %480
  %v483 = vadd.f32 %v473, %v481
  %v484 = vadd.f32 %v474, %v481
  %v485 = vadd.f32 %v475, %v481
  %v486 = vadd.f32 %v476, %v481
  %v487 = vmax.f32 %v483, 0.0
  %v488 = vmax.f32 %v484, 0.0
  %v489 = vmax.f32 %v485, 0.0
  %v490 = vmax.f32 %v486, 0.0
  %v491 = vpack.c.bf16 %v488, %v487
  %v492 = vpack.c.bf16 %v490, %v489
  %493 = vst [vmem:[%s6] sm:$0x77] %v491
  %vm494 = vcmask 1042432
  %vm495 = vcmask 63492
  %vm496 = vmor %vm495, %vm494
  %497 = vst.msk [vmem:[%s6 + $0x8] sm:$0x77] %vm496, %v492
  // Predicated region
  $region26: #{lenet_forward.3} parent=0 // pred_check
    _
  $region27: #{lenet_forward.3} parent=0 // pred_check_branch
    %499 = sbr.rel (0) target = $region29
  $region28: #{lenet_forward.3} parent=0 // pred_region
    _
  $region29: #{lenet_forward.3} parent=0 // pred_fallthru
    _
  // Predicated region
  $region30: #{lenet_forward.3} parent=0 // pred_check
    _
  $region31: #{lenet_forward.3} parent=0 // pred_check_branch
    %501 = sbr.rel (0) target = $region33
  $region32: #{lenet_forward.3} parent=0 // pred_region
    _
  $region33: #{lenet_forward.3} parent=0 // pred_fallthru
    _

// kernel: lenet_forward.4
$region0: #{lenet_forward.4}
  #allocation0 [shape = 'u32[]', space=smem, size = 0x4, offset = 0x4, fixed_abs, tag = 'smem constant byte address 0x4 - core index']
  #allocation1 [shape = 'u32[72,128]{1,0:T(1,128)}', space=vmem, size = 0x9000, scoped, tag = 'internal scratch']
  %s0 = inlined_call_operand.vmem [shape: bf16[16,150], index: 0, kind: input, shape index: {}]
  %s1 = inlined_call_operand.vmem [shape: f32[16,1], index: 1, kind: input, shape index: {}]
  %s2 = inlined_call_operand.vmem [shape: bf16[150,50], index: 2, kind: input, shape index: {}]
  %s3 = inlined_call_operand.vmem [shape: bf16[150,50], index: 3, kind: input, shape index: {}]
  %s4 = inlined_call_operand.vmem [shape: bf16[150,50], index: 4, kind: input, shape index: {}]
  %s5 = inlined_call_operand.vmem [shape: bf16[150,50], index: 5, kind: input, shape index: {}]
  %s6 = inlined_call_operand.vmem [shape: bf16[16,50], index: 6, kind: output, shape index: {}]
  %s7 = sld [smem:[#allocation0]]
  $region34: #{lenet_forward.4} parent=0
    _
  %s9 = ssub.s32 1, %s7
  %s10 = scalar_select 0, %s9, %s7
  // Predicated region
  $region2: #{lenet_forward.4} parent=0 // pred_check
    _
  $region3: #{lenet_forward.4} parent=0 // pred_check_branch
    %12 = sbr.rel (0) target = $region5
  $region4: #{lenet_forward.4} parent=0 // pred_region
    _
  $region5: #{lenet_forward.4} parent=0 // pred_fallthru
    _
  // Predicated region
  $region6: #{lenet_forward.4} parent=0 // pred_check
    _
  $region7: #{lenet_forward.4} parent=0 // pred_check_branch
    %14 = sbr.rel (0) target = $region9
  $region8: #{lenet_forward.4} parent=0 // pred_region
    _
  $region9: #{lenet_forward.4} parent=0 // pred_fallthru
    _
  // Predicated region
  $region10: #{lenet_forward.4} parent=0 // pred_check
    _
  $region11: #{lenet_forward.4} parent=0 // pred_check_branch
    %16 = sbr.rel (0) target = $region13
  $region12: #{lenet_forward.4} parent=0 // pred_region
    _
  $region13: #{lenet_forward.4} parent=0 // pred_fallthru
    _
  // Predicated region
  $region14: #{lenet_forward.4} parent=0 // pred_check
    _
  $region15: #{lenet_forward.4} parent=0 // pred_check_branch
    %18 = sbr.rel (0) target = $region17
  $region16: #{lenet_forward.4} parent=0 // pred_region
    _
  $region17: #{lenet_forward.4} parent=0 // pred_fallthru
    _
  // Predicated region
  $region18: #{lenet_forward.4} parent=0 // pred_check
    _
  $region19: #{lenet_forward.4} parent=0 // pred_check_branch
    %20 = sbr.rel (0) target = $region21
  $region20: #{lenet_forward.4} parent=0 // pred_region
    _
  $region21: #{lenet_forward.4} parent=0 // pred_fallthru
    _
  // Predicated region
  $region22: #{lenet_forward.4} parent=0 // pred_check
    _
  $region23: #{lenet_forward.4} parent=0 // pred_check_branch
    %22 = sbr.rel (0) target = $region25
  $region24: #{lenet_forward.4} parent=0 // pred_region
    _
  $region25: #{lenet_forward.4} parent=0 // pred_fallthru
    _
  %v24 = vld [vmem:[%s0] sm:$0xff]
  %v25 = vld [vmem:[%s0 + $0x8] sm:$0xff]
  %v26 = vld [vmem:[%s2] sm:$0xf]
  %v27 = vld [vmem:[%s2 + $0x4] sm:$0xf]
  %v28 = vld [vmem:[%s2 + $0x8] sm:$0xf]
  %v29 = vld [vmem:[%s2 + $0xc] sm:$0xf]
  %v30 = vld [vmem:[%s2 + $0x10] sm:$0xf]
  %v31 = vld [vmem:[%s2 + $0x14] sm:$0xf]
  %v32 = vld [vmem:[%s2 + $0x18] sm:$0xf]
  %v33 = vld [vmem:[%s2 + $0x1c] sm:$0xf]
  %v34 = vld [vmem:[%s2 + $0x20] sm:$0xf]
  %v35 = vld [vmem:[%s2 + $0x24] sm:$0xf]
  %v36 = vld [vmem:[%s2 + $0x28] sm:$0xf]
  %v37 = vld [vmem:[%s2 + $0x2c] sm:$0xf]
  %v38 = vld [vmem:[%s2 + $0x30] sm:$0xf]
  %v39 = vld [vmem:[%s2 + $0x34] sm:$0xf]
  %v40 = vld [vmem:[%s2 + $0x38] sm:$0xf]
  %v41 = vld [vmem:[%s2 + $0x3c] sm:$0xf]
  %v42 = vld [vmem:[%s2 + $0x40] sm:$0xf]
  %v43 = vld [vmem:[%s2 + $0x44] sm:$0xf]
  %v44 = vld [vmem:[%s2 + $0x48] sm:$0x7]
  %v47 = vunpack.c.l.b16 %v24
  %v48 = vunpack.c.h.b16 %v24
  %v49 = vunpack.c.l.b16 %v25
  %v50 = vunpack.c.h.b16 %v25
  %v51 = vpack.c.b16 %v49, %v47
  %v52 = vpack.c.b16 %v50, %v48
  %v73 = vunpack.c.l.b16 %v26
  %v74 = vunpack.c.l.b16 %v27
  %v75 = vunpack.c.l.b16 %v28
  %v76 = vunpack.c.l.b16 %v29
  %v77 = vunpack.c.l.b16 %v30
  %v78 = vunpack.c.l.b16 %v31
  %v79 = vunpack.c.l.b16 %v32
  %v80 = vunpack.c.l.b16 %v33
  %v81 = vunpack.c.l.b16 %v34
  %v82 = vunpack.c.l.b16 %v35
  %v83 = vunpack.c.l.b16 %v36
  %v84 = vunpack.c.l.b16 %v37
  %v85 = vunpack.c.l.b16 %v38
  %v86 = vunpack.c.l.b16 %v39
  %v87 = vunpack.c.l.b16 %v40
  %v88 = vunpack.c.l.b16 %v41
  %v89 = vunpack.c.l.b16 %v42
  %v90 = vunpack.c.l.b16 %v43
  %v91 = vunpack.c.l.b16 %v44
  %v92 = vpack.c.b16 %v74, %v73
  %v93 = vpack.c.b16 %v76, %v75
  %v94 = vpack.c.b16 %v78, %v77
  %v95 = vpack.c.b16 %v80, %v79
  %v96 = vpack.c.b16 %v82, %v81
  %v97 = vpack.c.b16 %v84, %v83
  %v98 = vpack.c.b16 %v86, %v85
  %v99 = vpack.c.b16 %v88, %v87
  %v100 = vpack.c.b16 %v90, %v89
  %v101 = vpack.c.b16 %v91, %v91
  %vm111 = vcmask 179200
  %v113 = vsel %vm111, %v52, 0
  %vm115 = vcmask 1042432
  %v117 = vsel %vm115, %v101, 0
  %119 = vmatpush.bf16.msra.mxu0 %v99
  %120 = vmatpush.bf16.msra.mxu0 %v98
  %121 = vmatpush.bf16.msra.mxu0 %v97
  %122 = vmatpush.bf16.msra.mxu0 %v96
  %123 = vmatpush.bf16.msra.mxu0 %v95
  %124 = vmatpush.bf16.msra.mxu0 %v94
  %125 = vmatpush.bf16.msra.mxu0 %v93
  %126 = vmatpush.bf16.msra.mxu0 %v92
  %127 = vmatmul.bf16.gmra.mxu0 %v51
  %v128 = vpop.f32.mrf.mxu0
  %v129 = vadd.f32 0.0, %v128
  %v130 = vpop.f32.mrf.mxu0
  %v131 = vadd.f32 0.0, %v130
  %132 = vdwg.mxu0
  %133 = vmatpush.bf16.msra.mxu0 0
  %134 = vmatpush.bf16.msra.mxu0 0
  %135 = vmatpush.bf16.msra.mxu0 0
  %136 = vmatpush.bf16.msra.mxu0 0
  %137 = vmatpush.bf16.msra.mxu0 0
  %138 = vmatpush.bf16.msra.mxu0 0
  %139 = vmatpush.bf16.msra.mxu0 %v117
  %140 = vmatpush.bf16.msra.mxu0 %v100
  %141 = vmatmul.bf16.gmra.mxu0 %v113
  %v142 = vpop.f32.mrf.mxu0
  %v143 = vadd.f32 %v129, %v142
  %v144 = vpop.f32.mrf.mxu0
  %v145 = vadd.f32 %v131, %v144
  %146 = vdwg.mxu0
  %v147 = vld [vmem:[%s3] sm:$0xf]
  %v148 = vld [vmem:[%s3 + $0x4] sm:$0xf]
  %v149 = vld [vmem:[%s3 + $0x8] sm:$0xf]
  %v150 = vld [vmem:[%s3 + $0xc] sm:$0xf]
  %v151 = vld [vmem:[%s3 + $0x10] sm:$0xf]
  %v152 = vld [vmem:[%s3 + $0x14] sm:$0xf]
  %v153 = vld [vmem:[%s3 + $0x18] sm:$0xf]
  %v154 = vld [vmem:[%s3 + $0x1c] sm:$0xf]
  %v155 = vld [vmem:[%s3 + $0x20] sm:$0xf]
  %v156 = vld [vmem:[%s3 + $0x24] sm:$0xf]
  %v157 = vld [vmem:[%s3 + $0x28] sm:$0xf]
  %v158 = vld [vmem:[%s3 + $0x2c] sm:$0xf]
  %v159 = vld [vmem:[%s3 + $0x30] sm:$0xf]
  %v160 = vld [vmem:[%s3 + $0x34] sm:$0xf]
  %v161 = vld [vmem:[%s3 + $0x38] sm:$0xf]
  %v162 = vld [vmem:[%s3 + $0x3c] sm:$0xf]
  %v163 = vld [vmem:[%s3 + $0x40] sm:$0xf]
  %v164 = vld [vmem:[%s3 + $0x44] sm:$0xf]
  %v165 = vld [vmem:[%s3 + $0x48] sm:$0x7]
  %v185 = vunpack.c.l.b16 %v147
  %v186 = vunpack.c.l.b16 %v148
  %v187 = vunpack.c.l.b16 %v149
  %v188 = vunpack.c.l.b16 %v150
  %v189 = vunpack.c.l.b16 %v151
  %v190 = vunpack.c.l.b16 %v152
  %v191 = vunpack.c.l.b16 %v153
  %v192 = vunpack.c.l.b16 %v154
  %v193 = vunpack.c.l.b16 %v155
  %v194 = vunpack.c.l.b16 %v156
  %v195 = vunpack.c.l.b16 %v157
  %v196 = vunpack.c.l.b16 %v158
  %v197 = vunpack.c.l.b16 %v159
  %v198 = vunpack.c.l.b16 %v160
  %v199 = vunpack.c.l.b16 %v161
  %v200 = vunpack.c.l.b16 %v162
  %v201 = vunpack.c.l.b16 %v163
  %v202 = vunpack.c.l.b16 %v164
  %v203 = vunpack.c.l.b16 %v165
  %v204 = vpack.c.b16 %v186, %v185
  %v205 = vpack.c.b16 %v188, %v187
  %v206 = vpack.c.b16 %v190, %v189
  %v207 = vpack.c.b16 %v192, %v191
  %v208 = vpack.c.b16 %v194, %v193
  %v209 = vpack.c.b16 %v196, %v195
  %v210 = vpack.c.b16 %v198, %v197
  %v211 = vpack.c.b16 %v200, %v199
  %v212 = vpack.c.b16 %v202, %v201
  %v213 = vpack.c.b16 %v203, %v203
  %v224 = vsel %vm115, %v213, 0
  %226 = vmatpush.bf16.msra.mxu0 %v211
  %227 = vmatpush.bf16.msra.mxu0 %v210
  %228 = vmatpush.bf16.msra.mxu0 %v209
  %229 = vmatpush.bf16.msra.mxu0 %v208
  %230 = vmatpush.bf16.msra.mxu0 %v207
  %231 = vmatpush.bf16.msra.mxu0 %v206
  %232 = vmatpush.bf16.msra.mxu0 %v205
  %233 = vmatpush.bf16.msra.mxu0 %v204
  %234 = vmatmul.bf16.gmra.mxu0 %v51
  %v235 = vpop.f32.mrf.mxu0
  %v236 = vadd.f32 0.0, %v235
  %v237 = vpop.f32.mrf.mxu0
  %v238 = vadd.f32 0.0, %v237
  %239 = vdwg.mxu0
  %240 = vmatpush.bf16.msra.mxu0 0
  %241 = vmatpush.bf16.msra.mxu0 0
  %242 = vmatpush.bf16.msra.mxu0 0
  %243 = vmatpush.bf16.msra.mxu0 0
  %244 = vmatpush.bf16.msra.mxu0 0
  %245 = vmatpush.bf16.msra.mxu0 0
  %246 = vmatpush.bf16.msra.mxu0 %v224
  %247 = vmatpush.bf16.msra.mxu0 %v212
  %248 = vmatmul.bf16.gmra.mxu0 %v113
  %v249 = vpop.f32.mrf.mxu0
  %v250 = vadd.f32 %v236, %v249
  %v251 = vpop.f32.mrf.mxu0
  %v252 = vadd.f32 %v238, %v251
  %253 = vdwg.mxu0
  %v254 = vld [vmem:[%s4] sm:$0xf]
  %v255 = vld [vmem:[%s4 + $0x4] sm:$0xf]
  %v256 = vld [vmem:[%s4 + $0x8] sm:$0xf]
  %v257 = vld [vmem:[%s4 + $0xc] sm:$0xf]
  %v258 = vld [vmem:[%s4 + $0x10] sm:$0xf]
  %v259 = vld [vmem:[%s4 + $0x14] sm:$0xf]
  %v260 = vld [vmem:[%s4 + $0x18] sm:$0xf]
  %v261 = vld [vmem:[%s4 + $0x1c] sm:$0xf]
  %v262 = vld [vmem:[%s4 + $0x20] sm:$0xf]
  %v263 = vld [vmem:[%s4 + $0x24] sm:$0xf]
  %v264 = vld [vmem:[%s4 + $0x28] sm:$0xf]
  %v265 = vld [vmem:[%s4 + $0x2c] sm:$0xf]
  %v266 = vld [vmem:[%s4 + $0x30] sm:$0xf]
  %v267 = vld [vmem:[%s4 + $0x34] sm:$0xf]
  %v268 = vld [vmem:[%s4 + $0x38] sm:$0xf]
  %v269 = vld [vmem:[%s4 + $0x3c] sm:$0xf]
  %v270 = vld [vmem:[%s4 + $0x40] sm:$0xf]
  %v271 = vld [vmem:[%s4 + $0x44] sm:$0xf]
  %v272 = vld [vmem:[%s4 + $0x48] sm:$0x7]
  %v292 = vunpack.c.l.b16 %v254
  %v293 = vunpack.c.l.b16 %v255
  %v294 = vunpack.c.l.b16 %v256
  %v295 = vunpack.c.l.b16 %v257
  %v296 = vunpack.c.l.b16 %v258
  %v297 = vunpack.c.l.b16 %v259
  %v298 = vunpack.c.l.b16 %v260
  %v299 = vunpack.c.l.b16 %v261
  %v300 = vunpack.c.l.b16 %v262
  %v301 = vunpack.c.l.b16 %v263
  %v302 = vunpack.c.l.b16 %v264
  %v303 = vunpack.c.l.b16 %v265
  %v304 = vunpack.c.l.b16 %v266
  %v305 = vunpack.c.l.b16 %v267
  %v306 = vunpack.c.l.b16 %v268
  %v307 = vunpack.c.l.b16 %v269
  %v308 = vunpack.c.l.b16 %v270
  %v309 = vunpack.c.l.b16 %v271
  %v310 = vunpack.c.l.b16 %v272
  %v311 = vpack.c.b16 %v293, %v292
  %v312 = vpack.c.b16 %v295, %v294
  %v313 = vpack.c.b16 %v297, %v296
  %v314 = vpack.c.b16 %v299, %v298
  %v315 = vpack.c.b16 %v301, %v300
  %v316 = vpack.c.b16 %v303, %v302
  %v317 = vpack.c.b16 %v305, %v304
  %v318 = vpack.c.b16 %v307, %v306
  %v319 = vpack.c.b16 %v309, %v308
  %v320 = vpack.c.b16 %v310, %v310
  %v331 = vsel %vm115, %v320, 0
  %333 = vmatpush.bf16.msra.mxu0 %v318
  %334 = vmatpush.bf16.msra.mxu0 %v317
  %335 = vmatpush.bf16.msra.mxu0 %v316
  %336 = vmatpush.bf16.msra.mxu0 %v315
  %337 = vmatpush.bf16.msra.mxu0 %v314
  %338 = vmatpush.bf16.msra.mxu0 %v313
  %339 = vmatpush.bf16.msra.mxu0 %v312
  %340 = vmatpush.bf16.msra.mxu0 %v311
  %341 = vmatmul.bf16.gmra.mxu0 %v51
  %v342 = vpop.f32.mrf.mxu0
  %v343 = vadd.f32 0.0, %v342
  %v344 = vpop.f32.mrf.mxu0
  %v345 = vadd.f32 0.0, %v344
  %346 = vdwg.mxu0
  %347 = vmatpush.bf16.msra.mxu0 0
  %348 = vmatpush.bf16.msra.mxu0 0
  %349 = vmatpush.bf16.msra.mxu0 0
  %350 = vmatpush.bf16.msra.mxu0 0
  %351 = vmatpush.bf16.msra.mxu0 0
  %352 = vmatpush.bf16.msra.mxu0 0
  %353 = vmatpush.bf16.msra.mxu0 %v331
  %354 = vmatpush.bf16.msra.mxu0 %v319
  %355 = vmatmul.bf16.gmra.mxu0 %v113
  %v356 = vpop.f32.mrf.mxu0
  %v357 = vadd.f32 %v343, %v356
  %v358 = vpop.f32.mrf.mxu0
  %v359 = vadd.f32 %v345, %v358
  %360 = vdwg.mxu0
  %v361 = vld [vmem:[%s5] sm:$0xf]
  %v362 = vld [vmem:[%s5 + $0x4] sm:$0xf]
  %v363 = vld [vmem:[%s5 + $0x8] sm:$0xf]
  %v364 = vld [vmem:[%s5 + $0xc] sm:$0xf]
  %v365 = vld [vmem:[%s5 + $0x10] sm:$0xf]
  %v366 = vld [vmem:[%s5 + $0x14] sm:$0xf]
  %v367 = vld [vmem:[%s5 + $0x18] sm:$0xf]
  %v368 = vld [vmem:[%s5 + $0x1c] sm:$0xf]
  %v369 = vld [vmem:[%s5 + $0x20] sm:$0xf]
  %v370 = vld [vmem:[%s5 + $0x24] sm:$0xf]
  %v371 = vld [vmem:[%s5 + $0x28] sm:$0xf]
  %v372 = vld [vmem:[%s5 + $0x2c] sm:$0xf]
  %v373 = vld [vmem:[%s5 + $0x30] sm:$0xf]
  %v374 = vld [vmem:[%s5 + $0x34] sm:$0xf]
  %v375 = vld [vmem:[%s5 + $0x38] sm:$0xf]
  %v376 = vld [vmem:[%s5 + $0x3c] sm:$0xf]
  %v377 = vld [vmem:[%s5 + $0x40] sm:$0xf]
  %v378 = vld [vmem:[%s5 + $0x44] sm:$0xf]
  %v379 = vld [vmem:[%s5 + $0x48] sm:$0x7]
  %v399 = vunpack.c.l.b16 %v361
  %v400 = vunpack.c.l.b16 %v362
  %v401 = vunpack.c.l.b16 %v363
  %v402 = vunpack.c.l.b16 %v364
  %v403 = vunpack.c.l.b16 %v365
  %v404 = vunpack.c.l.b16 %v366
  %v405 = vunpack.c.l.b16 %v367
  %v406 = vunpack.c.l.b16 %v368
  %v407 = vunpack.c.l.b16 %v369
  %v408 = vunpack.c.l.b16 %v370
  %v409 = vunpack.c.l.b16 %v371
  %v410 = vunpack.c.l.b16 %v372
  %v411 = vunpack.c.l.b16 %v373
  %v412 = vunpack.c.l.b16 %v374
  %v413 = vunpack.c.l.b16 %v375
  %v414 = vunpack.c.l.b16 %v376
  %v415 = vunpack.c.l.b16 %v377
  %v416 = vunpack.c.l.b16 %v378
  %v417 = vunpack.c.l.b16 %v379
  %v418 = vpack.c.b16 %v400, %v399
  %v419 = vpack.c.b16 %v402, %v401
  %v420 = vpack.c.b16 %v404, %v403
  %v421 = vpack.c.b16 %v406, %v405
  %v422 = vpack.c.b16 %v408, %v407
  %v423 = vpack.c.b16 %v410, %v409
  %v424 = vpack.c.b16 %v412, %v411
  %v425 = vpack.c.b16 %v414, %v413
  %v426 = vpack.c.b16 %v416, %v415
  %v427 = vpack.c.b16 %v417, %v417
  %v438 = vsel %vm115, %v427, 0
  %440 = vmatpush.bf16.msra.mxu0 %v425
  %441 = vmatpush.bf16.msra.mxu0 %v424
  %442 = vmatpush.bf16.msra.mxu0 %v423
  %443 = vmatpush.bf16.msra.mxu0 %v422
  %444 = vmatpush.bf16.msra.mxu0 %v421
  %445 = vmatpush.bf16.msra.mxu0 %v420
  %446 = vmatpush.bf16.msra.mxu0 %v419
  %447 = vmatpush.bf16.msra.mxu0 %v418
  %448 = vmatmul.bf16.gmra.mxu0 %v51
  %v449 = vpop.f32.mrf.mxu0
  %v450 = vadd.f32 0.0, %v449
  %v451 = vpop.f32.mrf.mxu0
  %v452 = vadd.f32 0.0, %v451
  %453 = vdwg.mxu0
  %454 = vmatpush.bf16.msra.mxu0 0
  %455 = vmatpush.bf16.msra.mxu0 0
  %456 = vmatpush.bf16.msra.mxu0 0
  %457 = vmatpush.bf16.msra.mxu0 0
  %458 = vmatpush.bf16.msra.mxu0 0
  %459 = vmatpush.bf16.msra.mxu0 0
  %460 = vmatpush.bf16.msra.mxu0 %v438
  %461 = vmatpush.bf16.msra.mxu0 %v426
  %462 = vmatmul.bf16.gmra.mxu0 %v113
  %v463 = vpop.f32.mrf.mxu0
  %v464 = vadd.f32 %v450, %v463
  %v465 = vpop.f32.mrf.mxu0
  %v466 = vadd.f32 %v452, %v465
  %467 = vdwg.mxu0
  %v468 = vmax.f32 %v143, %v250
  %v469 = vmax.f32 %v145, %v252
  %v470 = vmax.f32 %v357, %v464
  %v471 = vmax.f32 %v359, %v466
  %v472 = vmax.f32 %v468, %v470
  %v473 = vmax.f32 %v469, %v471
  %v474 = vld [vmem:[%s1] sm:$0xff]
  %v475 = vld [vmem:[%s1 + $0x8] sm:$0xff]
  %477 = vset.pattern.permute.xlu0 0
  %478 = vperm.xlu0 %477, %v474
  %v479 = vpop.permute.xlu0 %478
  %482 = vset.pattern.permute.xlu0 0
  %483 = vperm.xlu0 %482, %v475
  %v484 = vpop.permute.xlu0 %483
  %v486 = vadd.f32 %v472, %v479
  %v487 = vadd.f32 %v473, %v484
  %v488 = vmax.f32 %v486, 0.0
  %v489 = vmax.f32 %v487, 0.0
  %v490 = vpack.c.bf16 %v488, %v488
  %v491 = vpack.c.bf16 %v489, %v489
  %vm492 = vcmask 404480
  %493 = vst.msk [vmem:[%s6] sm:$0xf] %vm492, %v490
  %494 = vst.msk [vmem:[%s6 + $0x4] sm:$0xf] %vm492, %v491
  // Predicated region
  $region26: #{lenet_forward.4} parent=0 // pred_check
    _
  $region27: #{lenet_forward.4} parent=0 // pred_check_branch
    %496 = sbr.rel (0) target = $region29
  $region28: #{lenet_forward.4} parent=0 // pred_region
    _
  $region29: #{lenet_forward.4} parent=0 // pred_fallthru
    _
  // Predicated region
  $region30: #{lenet_forward.4} parent=0 // pred_check
    _
  $region31: #{lenet_forward.4} parent=0 // pred_check_branch
    %498 = sbr.rel (0) target = $region33
  $region32: #{lenet_forward.4} parent=0 // pred_region
    _
  $region33: #{lenet_forward.4} parent=0 // pred_fallthru
    _

// kernel: lenet_forward.5
$region0: #{lenet_forward.5}
  #allocation0 [shape = 'u32[]', space=smem, size = 0x4, offset = 0x4, fixed_abs, tag = 'smem constant byte address 0x4 - core index']
  #allocation1 [shape = 'u32[72,128]{1,0:T(1,128)}', space=vmem, size = 0x9000, scoped, tag = 'internal scratch']
  %s0 = inlined_call_operand.vmem [shape: bf16[400,2], index: 0, kind: input, shape index: {}]
  %s1 = inlined_call_operand.vmem [shape: bf16[120,400], index: 1, kind: input, shape index: {}]
  %s2 = inlined_call_operand.vmem [shape: f32[120,1], index: 2, kind: input, shape index: {}]
  %s3 = inlined_call_operand.vmem [shape: bf16[84,120], index: 3, kind: input, shape index: {}]
  %s4 = inlined_call_operand.vmem [shape: f32[84,1], index: 4, kind: input, shape index: {}]
  %s5 = inlined_call_operand.vmem [shape: bf16[10,84], index: 5, kind: input, shape index: {}]
  %s6 = inlined_call_operand.vmem [shape: f32[10,1], index: 6, kind: input, shape index: {}]
  %s7 = inlined_call_operand.vmem [shape: f32[10,2], index: 7, kind: output, shape index: {}]
  %s8 = sld [smem:[#allocation0]]
  $region38: #{lenet_forward.5} parent=0
    _
  %s10 = ssub.s32 1, %s8
  %s11 = scalar_select 0, %s10, %s8
  // Predicated region
  $region2: #{lenet_forward.5} parent=0 // pred_check
    _
  $region3: #{lenet_forward.5} parent=0 // pred_check_branch
    %13 = sbr.rel (0) target = $region5
  $region4: #{lenet_forward.5} parent=0 // pred_region
    _
  $region5: #{lenet_forward.5} parent=0 // pred_fallthru
    _
  // Predicated region
  $region6: #{lenet_forward.5} parent=0 // pred_check
    _
  $region7: #{lenet_forward.5} parent=0 // pred_check_branch
    %15 = sbr.rel (0) target = $region9
  $region8: #{lenet_forward.5} parent=0 // pred_region
    _
  $region9: #{lenet_forward.5} parent=0 // pred_fallthru
    _
  // Predicated region
  $region10: #{lenet_forward.5} parent=0 // pred_check
    _
  $region11: #{lenet_forward.5} parent=0 // pred_check_branch
    %17 = sbr.rel (0) target = $region13
  $region12: #{lenet_forward.5} parent=0 // pred_region
    _
  $region13: #{lenet_forward.5} parent=0 // pred_fallthru
    _
  // Predicated region
  $region14: #{lenet_forward.5} parent=0 // pred_check
    _
  $region15: #{lenet_forward.5} parent=0 // pred_check_branch
    %19 = sbr.rel (0) target = $region17
  $region16: #{lenet_forward.5} parent=0 // pred_region
    _
  $region17: #{lenet_forward.5} parent=0 // pred_fallthru
    _
  // Predicated region
  $region18: #{lenet_forward.5} parent=0 // pred_check
    _
  $region19: #{lenet_forward.5} parent=0 // pred_check_branch
    %21 = sbr.rel (0) target = $region21
  $region20: #{lenet_forward.5} parent=0 // pred_region
    _
  $region21: #{lenet_forward.5} parent=0 // pred_fallthru
    _
  // Predicated region
  $region22: #{lenet_forward.5} parent=0 // pred_check
    _
  $region23: #{lenet_forward.5} parent=0 // pred_check_branch
    %23 = sbr.rel (0) target = $region25
  $region24: #{lenet_forward.5} parent=0 // pred_region
    _
  $region25: #{lenet_forward.5} parent=0 // pred_fallthru
    _
  // Predicated region
  $region26: #{lenet_forward.5} parent=0 // pred_check
    _
  $region27: #{lenet_forward.5} parent=0 // pred_check_branch
    %25 = sbr.rel (0) target = $region29
  $region28: #{lenet_forward.5} parent=0 // pred_region
    _
  $region29: #{lenet_forward.5} parent=0 // pred_fallthru
    _
  %v27 = vld [vmem:[%s1] sm:$0xff]
  %v28 = vld [vmem:[%s1 + $0x8] sm:$0xff]
  %v29 = vld [vmem:[%s1 + $0x10] sm:$0xff]
  %v30 = vld [vmem:[%s1 + $0x18] sm:$0xff]
  %v31 = vld [vmem:[%s1 + $0x20] sm:$0xff]
  %v32 = vld [vmem:[%s1 + $0x28] sm:$0xff]
  %v33 = vld [vmem:[%s1 + $0x30] sm:$0xff]
  %v34 = vld [vmem:[%s1 + $0x38] sm:$0xff]
  %v35 = vld [vmem:[%s1 + $0x40] sm:$0xff]
  %v36 = vld [vmem:[%s1 + $0x48] sm:$0xff]
  %v37 = vld [vmem:[%s1 + $0x50] sm:$0xff]
  %v38 = vld [vmem:[%s1 + $0x58] sm:$0xff]
  %v39 = vld [vmem:[%s1 + $0x60] sm:$0xff]
  %v40 = vld [vmem:[%s1 + $0x68] sm:$0xff]
  %v41 = vld [vmem:[%s1 + $0x70] sm:$0xff]
  %v42 = vld [vmem:[%s1 + $0x78] sm:$0xff]
  %v43 = vld [vmem:[%s1 + $0x80] sm:$0xff]
  %v44 = vld [vmem:[%s1 + $0x88] sm:$0xff]
  %v45 = vld [vmem:[%s1 + $0x90] sm:$0xff]
  %v46 = vld [vmem:[%s1 + $0x98] sm:$0xff]
  %v47 = vld [vmem:[%s1 + $0xa0] sm:$0xff]
  %v48 = vld [vmem:[%s1 + $0xa8] sm:$0xff]
  %v49 = vld [vmem:[%s1 + $0xb0] sm:$0xff]
  %v50 = vld [vmem:[%s1 + $0xb8] sm:$0xff]
  %v51 = vld [vmem:[%s1 + $0xc0] sm:$0xff]
  %v52 = vld [vmem:[%s1 + $0xc8] sm:$0xff]
  %v53 = vld [vmem:[%s1 + $0xd0] sm:$0xff]
  %v54 = vld [vmem:[%s1 + $0xd8] sm:$0xff]
  %v55 = vld [vmem:[%s1 + $0xe0] sm:$0xff]
  %v56 = vld [vmem:[%s1 + $0xe8] sm:$0xff]
  %v57 = vld [vmem:[%s0] sm:$0xf]
  %v58 = vld [vmem:[%s0 + $0x4] sm:$0xf]
  %v59 = vld [vmem:[%s0 + $0x8] sm:$0xf]
  %v60 = vld [vmem:[%s0 + $0xc] sm:$0xf]
  %v61 = vld [vmem:[%s0 + $0x10] sm:$0xf]
  %v62 = vld [vmem:[%s0 + $0x14] sm:$0xf]
  %v63 = vld [vmem:[%s0 + $0x18] sm:$0xf]
  %v64 = vld [vmem:[%s0 + $0x1c] sm:$0xf]
  %v65 = vld [vmem:[%s0 + $0x20] sm:$0xf]
  %v66 = vld [vmem:[%s0 + $0x24] sm:$0xf]
  %v67 = vld [vmem:[%s0 + $0x28] sm:$0xf]
  %v68 = vld [vmem:[%s0 + $0x2c] sm:$0xf]
  %v69 = vld [vmem:[%s0 + $0x30] sm:$0xf]
  %v70 = vld [vmem:[%s0 + $0x34] sm:$0xf]
  %v71 = vld [vmem:[%s0 + $0x38] sm:$0xf]
  %v72 = vld [vmem:[%s0 + $0x3c] sm:$0xf]
  %v73 = vld [vmem:[%s0 + $0x40] sm:$0xf]
  %v74 = vld [vmem:[%s0 + $0x44] sm:$0xf]
  %v75 = vld [vmem:[%s0 + $0x48] sm:$0xf]
  %v76 = vld [vmem:[%s0 + $0x4c] sm:$0xf]
  %v77 = vld [vmem:[%s0 + $0x50] sm:$0xf]
  %v78 = vld [vmem:[%s0 + $0x54] sm:$0xf]
  %v79 = vld [vmem:[%s0 + $0x58] sm:$0xf]
  %v80 = vld [vmem:[%s0 + $0x5c] sm:$0xf]
  %v81 = vld [vmem:[%s0 + $0x60] sm:$0xf]
  %v82 = vld [vmem:[%s0 + $0x64] sm:$0xf]
  %v83 = vld [vmem:[%s0 + $0x68] sm:$0xf]
  %v84 = vld [vmem:[%s0 + $0x6c] sm:$0xf]
  %v85 = vld [vmem:[%s0 + $0x70] sm:$0xf]
  %v86 = vld [vmem:[%s0 + $0x74] sm:$0xf]
  %v87 = vld [vmem:[%s0 + $0x78] sm:$0xf]
  %v88 = vld [vmem:[%s0 + $0x7c] sm:$0xf]
  %v89 = vld [vmem:[%s0 + $0x80] sm:$0xf]
  %v90 = vld [vmem:[%s0 + $0x84] sm:$0xf]
  %v91 = vld [vmem:[%s0 + $0x88] sm:$0xf]
  %v92 = vld [vmem:[%s0 + $0x8c] sm:$0xf]
  %v93 = vld [vmem:[%s0 + $0x90] sm:$0xf]
  %v94 = vld [vmem:[%s0 + $0x94] sm:$0xf]
  %v95 = vld [vmem:[%s0 + $0x98] sm:$0xf]
  %v96 = vld [vmem:[%s0 + $0x9c] sm:$0xf]
  %v97 = vld [vmem:[%s0 + $0xa0] sm:$0xf]
  %v98 = vld [vmem:[%s0 + $0xa4] sm:$0xf]
  %v99 = vld [vmem:[%s0 + $0xa8] sm:$0xf]
  %v100 = vld [vmem:[%s0 + $0xac] sm:$0xf]
  %v101 = vld [vmem:[%s0 + $0xb0] sm:$0xf]
  %v102 = vld [vmem:[%s0 + $0xb4] sm:$0xf]
  %v103 = vld [vmem:[%s0 + $0xb8] sm:$0xf]
  %v104 = vld [vmem:[%s0 + $0xbc] sm:$0xf]
  %v105 = vld [vmem:[%s0 + $0xc0] sm:$0xf]
  %v106 = vld [vmem:[%s0 + $0xc4] sm:$0xf]
  %v107 = vld [vmem:[%s2] sm:$0xff]
  %v108 = vld [vmem:[%s2 + $0x8] sm:$0xff]
  %v109 = vld [vmem:[%s2 + $0x10] sm:$0xff]
  %v110 = vld [vmem:[%s2 + $0x18] sm:$0xff]
  %v111 = vld [vmem:[%s2 + $0x20] sm:$0xff]
  %v112 = vld [vmem:[%s2 + $0x28] sm:$0xff]
  %v113 = vld [vmem:[%s2 + $0x30] sm:$0xff]
  %v114 = vld [vmem:[%s2 + $0x38] sm:$0xff]
  %v115 = vld [vmem:[%s2 + $0x40] sm:$0xff]
  %v116 = vld [vmem:[%s2 + $0x48] sm:$0xff]
  %v117 = vld [vmem:[%s2 + $0x50] sm:$0xff]
  %v118 = vld [vmem:[%s2 + $0x58] sm:$0xff]
  %v119 = vld [vmem:[%s2 + $0x60] sm:$0xff]
  %v120 = vld [vmem:[%s2 + $0x68] sm:$0xff]
  %v121 = vld [vmem:[%s2 + $0x70] sm:$0xff]
  %123 = vset.pattern.permute.xlu0 0
  %124 = vperm.xlu0 %123, %v107
  %v125 = vpop.permute.xlu0 %124
  %128 = vset.pattern.permute.xlu0 0
  %129 = vperm.xlu0 %128, %v108
  %v130 = vpop.permute.xlu0 %129
  %133 = vset.pattern.permute.xlu0 0
  %134 = vperm.xlu0 %133, %v109
  %v135 = vpop.permute.xlu0 %134
  %138 = vset.pattern.permute.xlu0 0
  %139 = vperm.xlu0 %138, %v110
  %v140 = vpop.permute.xlu0 %139
  %143 = vset.pattern.permute.xlu0 0
  %144 = vperm.xlu0 %143, %v111
  %v145 = vpop.permute.xlu0 %144
  %148 = vset.pattern.permute.xlu0 0
  %149 = vperm.xlu0 %148, %v112
  %v150 = vpop.permute.xlu0 %149
  %153 = vset.pattern.permute.xlu0 0
  %154 = vperm.xlu0 %153, %v113
  %v155 = vpop.permute.xlu0 %154
  %158 = vset.pattern.permute.xlu0 0
  %159 = vperm.xlu0 %158, %v114
  %v160 = vpop.permute.xlu0 %159
  %163 = vset.pattern.permute.xlu0 0
  %164 = vperm.xlu0 %163, %v115
  %v165 = vpop.permute.xlu0 %164
  %168 = vset.pattern.permute.xlu0 0
  %169 = vperm.xlu0 %168, %v116
  %v170 = vpop.permute.xlu0 %169
  %173 = vset.pattern.permute.xlu0 0
  %174 = vperm.xlu0 %173, %v117
  %v175 = vpop.permute.xlu0 %174
  %178 = vset.pattern.permute.xlu0 0
  %179 = vperm.xlu0 %178, %v118
  %v180 = vpop.permute.xlu0 %179
  %183 = vset.pattern.permute.xlu0 0
  %184 = vperm.xlu0 %183, %v119
  %v185 = vpop.permute.xlu0 %184
  %188 = vset.pattern.permute.xlu0 0
  %189 = vperm.xlu0 %188, %v120
  %v190 = vpop.permute.xlu0 %189
  %193 = vset.pattern.permute.xlu0 0
  %194 = vperm.xlu0 %193, %v121
  %v195 = vpop.permute.xlu0 %194
  %v227 = vunpack.c.l.b16 %v27
  %v228 = vunpack.c.h.b16 %v27
  %v229 = vunpack.c.l.b16 %v28
  %v230 = vunpack.c.h.b16 %v28
  %v231 = vunpack.c.l.b16 %v29
  %v232 = vunpack.c.h.b16 %v29
  %v233 = vunpack.c.l.b16 %v30
  %v234 = vunpack.c.h.b16 %v30
  %v235 = vunpack.c.l.b16 %v31
  %v236 = vunpack.c.h.b16 %v31
  %v237 = vunpack.c.l.b16 %v32
  %v238 = vunpack.c.h.b16 %v32
  %v239 = vunpack.c.l.b16 %v33
  %v240 = vunpack.c.h.b16 %v33
  %v241 = vunpack.c.l.b16 %v34
  %v242 = vunpack.c.h.b16 %v34
  %v243 = vunpack.c.l.b16 %v35
  %v244 = vunpack.c.h.b16 %v35
  %v245 = vunpack.c.l.b16 %v36
  %v246 = vunpack.c.h.b16 %v36
  %v247 = vunpack.c.l.b16 %v37
  %v248 = vunpack.c.h.b16 %v37
  %v249 = vunpack.c.l.b16 %v38
  %v250 = vunpack.c.h.b16 %v38
  %v251 = vunpack.c.l.b16 %v39
  %v252 = vunpack.c.h.b16 %v39
  %v253 = vunpack.c.l.b16 %v40
  %v254 = vunpack.c.h.b16 %v40
  %v255 = vunpack.c.l.b16 %v41
  %v256 = vunpack.c.h.b16 %v41
  %v257 = vunpack.c.l.b16 %v42
  %v258 = vunpack.c.h.b16 %v42
  %v259 = vunpack.c.l.b16 %v43
  %v260 = vunpack.c.h.b16 %v43
  %v261 = vunpack.c.l.b16 %v44
  %v262 = vunpack.c.h.b16 %v44
  %v263 = vunpack.c.l.b16 %v45
  %v264 = vunpack.c.h.b16 %v45
  %v265 = vunpack.c.l.b16 %v46
  %v266 = vunpack.c.h.b16 %v46
  %v267 = vunpack.c.l.b16 %v47
  %v268 = vunpack.c.h.b16 %v47
  %v269 = vunpack.c.l.b16 %v48
  %v270 = vunpack.c.h.b16 %v48
  %v271 = vunpack.c.l.b16 %v49
  %v272 = vunpack.c.h.b16 %v49
  %v273 = vunpack.c.l.b16 %v50
  %v274 = vunpack.c.h.b16 %v50
  %v275 = vunpack.c.l.b16 %v51
  %v276 = vunpack.c.h.b16 %v51
  %v277 = vunpack.c.l.b16 %v52
  %v278 = vunpack.c.h.b16 %v52
  %v279 = vunpack.c.l.b16 %v53
  %v280 = vunpack.c.h.b16 %v53
  %v281 = vunpack.c.l.b16 %v54
  %v282 = vunpack.c.h.b16 %v54
  %v283 = vunpack.c.l.b16 %v55
  %v284 = vunpack.c.h.b16 %v55
  %v285 = vunpack.c.l.b16 %v56
  %v286 = vunpack.c.h.b16 %v56
  %v287 = vpack.c.b16 %v231, %v227
  %v288 = vpack.c.b16 %v232, %v228
  %v289 = vpack.c.b16 %v233, %v229
  %v290 = vpack.c.b16 %v234, %v230
  %v291 = vpack.c.b16 %v239, %v235
  %v292 = vpack.c.b16 %v240, %v236
  %v293 = vpack.c.b16 %v241, %v237
  %v294 = vpack.c.b16 %v242, %v238
  %v295 = vpack.c.b16 %v247, %v243
  %v296 = vpack.c.b16 %v248, %v244
  %v297 = vpack.c.b16 %v249, %v245
  %v298 = vpack.c.b16 %v250, %v246
  %v299 = vpack.c.b16 %v255, %v251
  %v300 = vpack.c.b16 %v256, %v252
  %v301 = vpack.c.b16 %v257, %v253
  %v302 = vpack.c.b16 %v258, %v254
  %v303 = vpack.c.b16 %v263, %v259
  %v304 = vpack.c.b16 %v264, %v260
  %v305 = vpack.c.b16 %v265, %v261
  %v306 = vpack.c.b16 %v266, %v262
  %v307 = vpack.c.b16 %v271, %v267
  %v308 = vpack.c.b16 %v272, %v268
  %v309 = vpack.c.b16 %v273, %v269
  %v310 = vpack.c.b16 %v274, %v270
  %v311 = vpack.c.b16 %v279, %v275
  %v312 = vpack.c.b16 %v280, %v276
  %v313 = vpack.c.b16 %v281, %v277
  %v314 = vpack.c.b16 %v282, %v278
  %v315 = vpack.c.b16 %v283, %v283
  %v316 = vpack.c.b16 %v284, %v284
  %v317 = vpack.c.b16 %v285, %v285
  %v318 = vpack.c.b16 %v286, %v286
  %v393 = vunpack.c.l.b16 %v57
  %v394 = vunpack.c.l.b16 %v58
  %v395 = vunpack.c.l.b16 %v59
  %v396 = vunpack.c.l.b16 %v60
  %v397 = vunpack.c.l.b16 %v61
  %v398 = vunpack.c.l.b16 %v62
  %v399 = vunpack.c.l.b16 %v63
  %v400 = vunpack.c.l.b16 %v64
  %v401 = vunpack.c.l.b16 %v65
  %v402 = vunpack.c.l.b16 %v66
  %v403 = vunpack.c.l.b16 %v67
  %v404 = vunpack.c.l.b16 %v68
  %v405 = vunpack.c.l.b16 %v69
  %v406 = vunpack.c.l.b16 %v70
  %v407 = vunpack.c.l.b16 %v71
  %v408 = vunpack.c.l.b16 %v72
  %v409 = vunpack.c.l.b16 %v73
  %v410 = vunpack.c.l.b16 %v74
  %v411 = vunpack.c.l.b16 %v75
  %v412 = vunpack.c.l.b16 %v76
  %v413 = vunpack.c.l.b16 %v77
  %v414 = vunpack.c.l.b16 %v78
  %v415 = vunpack.c.l.b16 %v79
  %v416 = vunpack.c.l.b16 %v80
  %v417 = vunpack.c.l.b16 %v81
  %v418 = vunpack.c.l.b16 %v82
  %v419 = vunpack.c.l.b16 %v83
  %v420 = vunpack.c.l.b16 %v84
  %v421 = vunpack.c.l.b16 %v85
  %v422 = vunpack.c.l.b16 %v86
  %v423 = vunpack.c.l.b16 %v87
  %v424 = vunpack.c.l.b16 %v88
  %v425 = vunpack.c.l.b16 %v89
  %v426 = vunpack.c.l.b16 %v90
  %v427 = vunpack.c.l.b16 %v91
  %v428 = vunpack.c.l.b16 %v92
  %v429 = vunpack.c.l.b16 %v93
  %v430 = vunpack.c.l.b16 %v94
  %v431 = vunpack.c.l.b16 %v95
  %v432 = vunpack.c.l.b16 %v96
  %v433 = vunpack.c.l.b16 %v97
  %v434 = vunpack.c.l.b16 %v98
  %v435 = vunpack.c.l.b16 %v99
  %v436 = vunpack.c.l.b16 %v100
  %v437 = vunpack.c.l.b16 %v101
  %v438 = vunpack.c.l.b16 %v102
  %v439 = vunpack.c.l.b16 %v103
  %v440 = vunpack.c.l.b16 %v104
  %v441 = vunpack.c.l.b16 %v105
  %v442 = vunpack.c.l.b16 %v106
  %v443 = vpack.c.b16 %v394, %v393
  %v444 = vpack.c.b16 %v396, %v395
  %v445 = vpack.c.b16 %v398, %v397
  %v446 = vpack.c.b16 %v400, %v399
  %v447 = vpack.c.b16 %v402, %v401
  %v448 = vpack.c.b16 %v404, %v403
  %v449 = vpack.c.b16 %v406, %v405
  %v450 = vpack.c.b16 %v408, %v407
  %v451 = vpack.c.b16 %v410, %v409
  %v452 = vpack.c.b16 %v412, %v411
  %v453 = vpack.c.b16 %v414, %v413
  %v454 = vpack.c.b16 %v416, %v415
  %v455 = vpack.c.b16 %v418, %v417
  %v456 = vpack.c.b16 %v420, %v419
  %v457 = vpack.c.b16 %v422, %v421
  %v458 = vpack.c.b16 %v424, %v423
  %v459 = vpack.c.b16 %v426, %v425
  %v460 = vpack.c.b16 %v428, %v427
  %v461 = vpack.c.b16 %v430, %v429
  %v462 = vpack.c.b16 %v432, %v431
  %v463 = vpack.c.b16 %v434, %v433
  %v464 = vpack.c.b16 %v436, %v435
  %v465 = vpack.c.b16 %v438, %v437
  %v466 = vpack.c.b16 %v440, %v439
  %v467 = vpack.c.b16 %v442, %v441
  %vm493 = vcmask 130048
  %v495 = vsel %vm493, %v290, 0
  %v498 = vsel %vm493, %v294, 0
  %v501 = vsel %vm493, %v298, 0
  %v504 = vsel %vm493, %v302, 0
  %v507 = vsel %vm493, %v306, 0
  %v510 = vsel %vm493, %v310, 0
  %v513 = vsel %vm493, %v314, 0
  %v516 = vsel %vm493, %v318, 0
  %518 = vmatpush.bf16.msra.mxu0 %v450
  %519 = vmatpush.bf16.msra.mxu0 %v449
  %520 = vmatpush.bf16.msra.mxu0 %v448
  %521 = vmatpush.bf16.msra.mxu0 %v447
  %522 = vmatpush.bf16.msra.mxu0 %v446
  %523 = vmatpush.bf16.msra.mxu0 %v445
  %524 = vmatpush.bf16.msra.mxu0 %v444
  %525 = vmatpush.bf16.msra.mxu0 %v443
  %526 = vmatmul.bf16.gmra.mxu0 %v287
  %v527 = vpop.f32.mrf.mxu0
  %v528 = vadd.f32 %v125, %v527
  %v529 = vpop.f32.mrf.mxu0
  %v530 = vadd.f32 %v130, %v529
  %531 = vmatmul.bf16.gmra.mxu0 %v291
  %v532 = vpop.f32.mrf.mxu0
  %v533 = vadd.f32 %v135, %v532
  %v534 = vpop.f32.mrf.mxu0
  %v535 = vadd.f32 %v140, %v534
  %536 = vmatmul.bf16.gmra.mxu0 %v295
  %v537 = vpop.f32.mrf.mxu0
  %v538 = vadd.f32 %v145, %v537
  %v539 = vpop.f32.mrf.mxu0
  %v540 = vadd.f32 %v150, %v539
  %541 = vmatmul.bf16.gmra.mxu0 %v299
  %v542 = vpop.f32.mrf.mxu0
  %v543 = vadd.f32 %v155, %v542
  %v544 = vpop.f32.mrf.mxu0
  %v545 = vadd.f32 %v160, %v544
  %546 = vmatmul.bf16.gmra.mxu0 %v303
  %v547 = vpop.f32.mrf.mxu0
  %v548 = vadd.f32 %v165, %v547
  %v549 = vpop.f32.mrf.mxu0
  %v550 = vadd.f32 %v170, %v549
  %551 = vmatmul.bf16.gmra.mxu0 %v307
  %v552 = vpop.f32.mrf.mxu0
  %v553 = vadd.f32 %v175, %v552
  %v554 = vpop.f32.mrf.mxu0
  %v555 = vadd.f32 %v180, %v554
  %556 = vmatmul.bf16.gmra.mxu0 %v311
  %v557 = vpop.f32.mrf.mxu0
  %v558 = vadd.f32 %v185, %v557
  %v559 = vpop.f32.mrf.mxu0
  %v560 = vadd.f32 %v190, %v559
  %561 = vmatmul.bf16.gmra.mxu0 %v315
  %v562 = vpop.f32.mrf.mxu0
  %v563 = vadd.f32 %v195, %v562
  %v564 = vpop.f32.mrf.mxu0
  %565 = vdwg.mxu0
  %566 = vmatpush.bf16.msra.mxu0 %v458
  %567 = vmatpush.bf16.msra.mxu0 %v457
  %568 = vmatpush.bf16.msra.mxu0 %v456
  %569 = vmatpush.bf16.msra.mxu0 %v455
  %570 = vmatpush.bf16.msra.mxu0 %v454
  %571 = vmatpush.bf16.msra.mxu0 %v453
  %572 = vmatpush.bf16.msra.mxu0 %v452
  %573 = vmatpush.bf16.msra.mxu0 %v451
  %574 = vmatmul.bf16.gmra.mxu0 %v288
  %v575 = vpop.f32.mrf.mxu0
  %v576 = vadd.f32 %v528, %v575
  %v577 = vpop.f32.mrf.mxu0
  %v578 = vadd.f32 %v530, %v577
  %579 = vmatmul.bf16.gmra.mxu0 %v292
  %v580 = vpop.f32.mrf.mxu0
  %v581 = vadd.f32 %v533, %v580
  %v582 = vpop.f32.mrf.mxu0
  %v583 = vadd.f32 %v535, %v582
  %584 = vmatmul.bf16.gmra.mxu0 %v296
  %v585 = vpop.f32.mrf.mxu0
  %v586 = vadd.f32 %v538, %v585
  %v587 = vpop.f32.mrf.mxu0
  %v588 = vadd.f32 %v540, %v587
  %589 = vmatmul.bf16.gmra.mxu0 %v300
  %v590 = vpop.f32.mrf.mxu0
  %v591 = vadd.f32 %v543, %v590
  %v592 = vpop.f32.mrf.mxu0
  %v593 = vadd.f32 %v545, %v592
  %594 = vmatmul.bf16.gmra.mxu0 %v304
  %v595 = vpop.f32.mrf.mxu0
  %v596 = vadd.f32 %v548, %v595
  %v597 = vpop.f32.mrf.mxu0
  %v598 = vadd.f32 %v550, %v597
  %599 = vmatmul.bf16.gmra.mxu0 %v308
  %v600 = vpop.f32.mrf.mxu0
  %v601 = vadd.f32 %v553, %v600
  %v602 = vpop.f32.mrf.mxu0
  %v603 = vadd.f32 %v555, %v602
  %604 = vmatmul.bf16.gmra.mxu0 %v312
  %v605 = vpop.f32.mrf.mxu0
  %v606 = vadd.f32 %v558, %v605
  %v607 = vpop.f32.mrf.mxu0
  %v608 = vadd.f32 %v560, %v607
  %609 = vmatmul.bf16.gmra.mxu0 %v316
  %v610 = vpop.f32.mrf.mxu0
  %v611 = vadd.f32 %v563, %v610
  %v612 = vpop.f32.mrf.mxu0
  %613 = vdwg.mxu0
  %614 = vmatpush.bf16.msra.mxu0 %v466
  %615 = vmatpush.bf16.msra.mxu0 %v465
  %616 = vmatpush.bf16.msra.mxu0 %v464
  %617 = vmatpush.bf16.msra.mxu0 %v463
  %618 = vmatpush.bf16.msra.mxu0 %v462
  %619 = vmatpush.bf16.msra.mxu0 %v461
  %620 = vmatpush.bf16.msra.mxu0 %v460
  %621 = vmatpush.bf16.msra.mxu0 %v459
  %622 = vmatmul.bf16.gmra.mxu0 %v289
  %v623 = vpop.f32.mrf.mxu0
  %v624 = vadd.f32 %v576, %v623
  %v625 = vpop.f32.mrf.mxu0
  %v626 = vadd.f32 %v578, %v625
  %627 = vmatmul.bf16.gmra.mxu0 %v293
  %v628 = vpop.f32.mrf.mxu0
  %v629 = vadd.f32 %v581, %v628
  %v630 = vpop.f32.mrf.mxu0
  %v631 = vadd.f32 %v583, %v630
  %632 = vmatmul.bf16.gmra.mxu0 %v297
  %v633 = vpop.f32.mrf.mxu0
  %v634 = vadd.f32 %v586, %v633
  %v635 = vpop.f32.mrf.mxu0
  %v636 = vadd.f32 %v588, %v635
  %637 = vmatmul.bf16.gmra.mxu0 %v301
  %v638 = vpop.f32.mrf.mxu0
  %v639 = vadd.f32 %v591, %v638
  %v640 = vpop.f32.mrf.mxu0
  %v641 = vadd.f32 %v593, %v640
  %642 = vmatmul.bf16.gmra.mxu0 %v305
  %v643 = vpop.f32.mrf.mxu0
  %v644 = vadd.f32 %v596, %v643
  %v645 = vpop.f32.mrf.mxu0
  %v646 = vadd.f32 %v598, %v645
  %647 = vmatmul.bf16.gmra.mxu0 %v309
  %v648 = vpop.f32.mrf.mxu0
  %v649 = vadd.f32 %v601, %v648
  %v650 = vpop.f32.mrf.mxu0
  %v651 = vadd.f32 %v603, %v650
  %652 = vmatmul.bf16.gmra.mxu0 %v313
  %v653 = vpop.f32.mrf.mxu0
  %v654 = vadd.f32 %v606, %v653
  %v655 = vpop.f32.mrf.mxu0
  %v656 = vadd.f32 %v608, %v655
  %657 = vmatmul.bf16.gmra.mxu0 %v317
  %v658 = vpop.f32.mrf.mxu0
  %v659 = vadd.f32 %v611, %v658
  %v660 = vpop.f32.mrf.mxu0
  %661 = vdwg.mxu0
  %662 = vmatpush.bf16.msra.mxu0 0
  %663 = vmatpush.bf16.msra.mxu0 0
  %664 = vmatpush.bf16.msra.mxu0 0
  %665 = vmatpush.bf16.msra.mxu0 0
  %666 = vmatpush.bf16.msra.mxu0 0
  %667 = vmatpush.bf16.msra.mxu0 0
  %668 = vmatpush.bf16.msra.mxu0 0
  %669 = vmatpush.bf16.msra.mxu0 %v467
  %670 = vmatmul.bf16.gmra.mxu0 %v495
  %v671 = vpop.f32.mrf.mxu0
  %v672 = vadd.f32 %v624, %v671
  %v673 = vpop.f32.mrf.mxu0
  %v674 = vadd.f32 %v626, %v673
  %675 = vmatmul.bf16.gmra.mxu0 %v498
  %v676 = vpop.f32.mrf.mxu0
  %v677 = vadd.f32 %v629, %v676
  %v678 = vpop.f32.mrf.mxu0
  %v679 = vadd.f32 %v631, %v678
  %680 = vmatmul.bf16.gmra.mxu0 %v501
  %v681 = vpop.f32.mrf.mxu0
  %v682 = vadd.f32 %v634, %v681
  %v683 = vpop.f32.mrf.mxu0
  %v684 = vadd.f32 %v636, %v683
  %685 = vmatmul.bf16.gmra.mxu0 %v504
  %v686 = vpop.f32.mrf.mxu0
  %v687 = vadd.f32 %v639, %v686
  %v688 = vpop.f32.mrf.mxu0
  %v689 = vadd.f32 %v641, %v688
  %690 = vmatmul.bf16.gmra.mxu0 %v507
  %v691 = vpop.f32.mrf.mxu0
  %v692 = vadd.f32 %v644, %v691
  %v693 = vpop.f32.mrf.mxu0
  %v694 = vadd.f32 %v646, %v693
  %695 = vmatmul.bf16.gmra.mxu0 %v510
  %v696 = vpop.f32.mrf.mxu0
  %v697 = vadd.f32 %v649, %v696
  %v698 = vpop.f32.mrf.mxu0
  %v699 = vadd.f32 %v651, %v698
  %700 = vmatmul.bf16.gmra.mxu0 %v513
  %v701 = vpop.f32.mrf.mxu0
  %v702 = vadd.f32 %v654, %v701
  %v703 = vpop.f32.mrf.mxu0
  %v704 = vadd.f32 %v656, %v703
  %705 = vmatmul.bf16.gmra.mxu0 %v516
  %v706 = vpop.f32.mrf.mxu0
  %v707 = vadd.f32 %v659, %v706
  %v708 = vpop.f32.mrf.mxu0
  %709 = vdwg.mxu0
  %v710 = vmax.f32 %v672, 0.0
  %v711 = vmax.f32 %v674, 0.0
  %v712 = vmax.f32 %v677, 0.0
  %v713 = vmax.f32 %v679, 0.0
  %v714 = vmax.f32 %v682, 0.0
  %v715 = vmax.f32 %v684, 0.0
  %v716 = vmax.f32 %v687, 0.0
  %v717 = vmax.f32 %v689, 0.0
  %v718 = vmax.f32 %v692, 0.0
  %v719 = vmax.f32 %v694, 0.0
  %v720 = vmax.f32 %v697, 0.0
  %v721 = vmax.f32 %v699, 0.0
  %v722 = vmax.f32 %v702, 0.0
  %v723 = vmax.f32 %v704, 0.0
  %v724 = vmax.f32 %v707, 0.0
  %v725 = vpack.c.bf16 %v711, %v710
  %v726 = vpack.c.bf16 %v713, %v712
  %v727 = vpack.c.bf16 %v715, %v714
  %v728 = vpack.c.bf16 %v717, %v716
  %v729 = vpack.c.bf16 %v719, %v718
  %v730 = vpack.c.bf16 %v721, %v720
  %v731 = vpack.c.bf16 %v723, %v722
  %v732 = vpack.c.bf16 %v724, %v724
  %v733 = vld [vmem:[%s3] sm:$0xf]
  %v734 = vld [vmem:[%s3 + $0x4] sm:$0xf]
  %v735 = vld [vmem:[%s3 + $0x8] sm:$0xf]
  %v736 = vld [vmem:[%s3 + $0xc] sm:$0xf]
  %v737 = vld [vmem:[%s3 + $0x10] sm:$0xf]
  %v738 = vld [vmem:[%s3 + $0x14] sm:$0xf]
  %v739 = vld [vmem:[%s3 + $0x18] sm:$0xf]
  %v740 = vld [vmem:[%s3 + $0x1c] sm:$0xf]
  %v741 = vld [vmem:[%s3 + $0x20] sm:$0xf]
  %v742 = vld [vmem:[%s3 + $0x24] sm:$0xf]
  %v743 = vld [vmem:[%s3 + $0x28] sm:$0x3]
  %v744 = vld [vmem:[%s4] sm:$0xff]
  %v745 = vld [vmem:[%s4 + $0x8] sm:$0xff]
  %v746 = vld [vmem:[%s4 + $0x10] sm:$0xff]
  %v747 = vld [vmem:[%s4 + $0x18] sm:$0xff]
  %v748 = vld [vmem:[%s4 + $0x20] sm:$0xff]
  %v749 = vld [vmem:[%s4 + $0x28] sm:$0xff]
  %v750 = vld [vmem:[%s4 + $0x30] sm:$0xff]
  %v751 = vld [vmem:[%s4 + $0x38] sm:$0xff]
  %v752 = vld [vmem:[%s4 + $0x40] sm:$0xff]
  %v753 = vld [vmem:[%s4 + $0x48] sm:$0xff]
  %v754 = vld [vmem:[%s4 + $0x50] sm:$0xf]
  %756 = vset.pattern.permute.xlu0 0
  %757 = vperm.xlu0 %756, %v744
  %v758 = vpop.permute.xlu0 %757
  %761 = vset.pattern.permute.xlu0 0
  %762 = vperm.xlu0 %761, %v745
  %v763 = vpop.permute.xlu0 %762
  %766 = vset.pattern.permute.xlu0 0
  %767 = vperm.xlu0 %766, %v746
  %v768 = vpop.permute.xlu0 %767
  %771 = vset.pattern.permute.xlu0 0
  %772 = vperm.xlu0 %771, %v747
  %v773 = vpop.permute.xlu0 %772
  %776 = vset.pattern.permute.xlu0 0
  %777 = vperm.xlu0 %776, %v748
  %v778 = vpop.permute.xlu0 %777
  %781 = vset.pattern.permute.xlu0 0
  %782 = vperm.xlu0 %781, %v749
  %v783 = vpop.permute.xlu0 %782
  %786 = vset.pattern.permute.xlu0 0
  %787 = vperm.xlu0 %786, %v750
  %v788 = vpop.permute.xlu0 %787
  %791 = vset.pattern.permute.xlu0 0
  %792 = vperm.xlu0 %791, %v751
  %v793 = vpop.permute.xlu0 %792
  %796 = vset.pattern.permute.xlu0 0
  %797 = vperm.xlu0 %796, %v752
  %v798 = vpop.permute.xlu0 %797
  %801 = vset.pattern.permute.xlu0 0
  %802 = vperm.xlu0 %801, %v753
  %v803 = vpop.permute.xlu0 %802
  %806 = vset.pattern.permute.xlu0 0
  %807 = vperm.xlu0 %806, %v754
  %v808 = vpop.permute.xlu0 %807
  %v821 = vunpack.c.l.b16 %v733
  %v822 = vunpack.c.l.b16 %v734
  %v823 = vunpack.c.l.b16 %v735
  %v824 = vunpack.c.l.b16 %v736
  %v825 = vunpack.c.l.b16 %v737
  %v826 = vunpack.c.l.b16 %v738
  %v827 = vunpack.c.l.b16 %v739
  %v828 = vunpack.c.l.b16 %v740
  %v829 = vunpack.c.l.b16 %v741
  %v830 = vunpack.c.l.b16 %v742
  %v831 = vunpack.c.l.b16 %v743
  %v832 = vpack.c.b16 %v822, %v821
  %v833 = vpack.c.b16 %v824, %v823
  %v834 = vpack.c.b16 %v826, %v825
  %v835 = vpack.c.b16 %v828, %v827
  %v836 = vpack.c.b16 %v830, %v829
  %v837 = vpack.c.b16 %v831, %v831
  %vm838 = vcmask 982016
  %v840 = vsel %vm838, %v832, 0
  %v843 = vsel %vm838, %v833, 0
  %v846 = vsel %vm838, %v834, 0
  %v849 = vsel %vm838, %v835, 0
  %v852 = vsel %vm838, %v836, 0
  %v855 = vsel %vm838, %v837, 0
  %vm857 = vcmask 1043456
  %v859 = vsel %vm857, %v732, 0
  %861 = vmatpush.bf16.msra.mxu0 %v859
  %862 = vmatpush.bf16.msra.mxu0 %v731
  %863 = vmatpush.bf16.msra.mxu0 %v730
  %864 = vmatpush.bf16.msra.mxu0 %v729
  %865 = vmatpush.bf16.msra.mxu0 %v728
  %866 = vmatpush.bf16.msra.mxu0 %v727
  %867 = vmatpush.bf16.msra.mxu0 %v726
  %868 = vmatpush.bf16.msra.mxu0 %v725
  %869 = vmatmul.bf16.gmra.mxu0 %v840
  %v870 = vpop.f32.mrf.mxu0
  %v871 = vadd.f32 %v758, %v870
  %v872 = vpop.f32.mrf.mxu0
  %v873 = vadd.f32 %v763, %v872
  %874 = vmatmul.bf16.gmra.mxu0 %v843
  %v875 = vpop.f32.mrf.mxu0
  %v876 = vadd.f32 %v768, %v875
  %v877 = vpop.f32.mrf.mxu0
  %v878 = vadd.f32 %v773, %v877
  %879 = vmatmul.bf16.gmra.mxu0 %v846
  %v880 = vpop.f32.mrf.mxu0
  %v881 = vadd.f32 %v778, %v880
  %v882 = vpop.f32.mrf.mxu0
  %v883 = vadd.f32 %v783, %v882
  %884 = vmatmul.bf16.gmra.mxu0 %v849
  %v885 = vpop.f32.mrf.mxu0
  %v886 = vadd.f32 %v788, %v885
  %v887 = vpop.f32.mrf.mxu0
  %v888 = vadd.f32 %v793, %v887
  %889 = vmatmul.bf16.gmra.mxu0 %v852
  %v890 = vpop.f32.mrf.mxu0
  %v891 = vadd.f32 %v798, %v890
  %v892 = vpop.f32.mrf.mxu0
  %v893 = vadd.f32 %v803, %v892
  %894 = vmatmul.bf16.gmra.mxu0 %v855
  %v895 = vpop.f32.mrf.mxu0
  %v896 = vadd.f32 %v808, %v895
  %v897 = vpop.f32.mrf.mxu0
  %898 = vdwg.mxu0
  %v899 = vmax.f32 %v871, 0.0
  %v900 = vmax.f32 %v873, 0.0
  %v901 = vmax.f32 %v876, 0.0
  %v902 = vmax.f32 %v878, 0.0
  %v903 = vmax.f32 %v881, 0.0
  %v904 = vmax.f32 %v883, 0.0
  %v905 = vmax.f32 %v886, 0.0
  %v906 = vmax.f32 %v888, 0.0
  %v907 = vmax.f32 %v891, 0.0
  %v908 = vmax.f32 %v893, 0.0
  %v909 = vmax.f32 %v896, 0.0
  %v910 = vpack.c.bf16 %v900, %v899
  %v911 = vpack.c.bf16 %v902, %v901
  %v912 = vpack.c.bf16 %v904, %v903
  %v913 = vpack.c.bf16 %v906, %v905
  %v914 = vpack.c.bf16 %v908, %v907
  %v915 = vpack.c.bf16 %v909, %v909
  %v916 = vld [vmem:[%s5] sm:$0xf]
  %v917 = vld [vmem:[%s5 + $0x4] sm:$0x1]
  %v918 = vld [vmem:[%s6] sm:$0xff]
  %v919 = vld [vmem:[%s6 + $0x8] sm:$0x3]
  %921 = vset.pattern.permute.xlu0 0
  %922 = vperm.xlu0 %921, %v918
  %v923 = vpop.permute.xlu0 %922
  %926 = vset.pattern.permute.xlu0 0
  %927 = vperm.xlu0 %926, %v919
  %v928 = vpop.permute.xlu0 %927
  %v932 = vunpack.c.l.b16 %v916
  %v933 = vunpack.c.l.b16 %v917
  %v934 = vpack.c.b16 %v933, %v932
  %vm935 = vcmask 687104
  %v937 = vsel %vm935, %v934, 0
  %vm939 = vcmask 1041408
  %v941 = vsel %vm939, %v915, 0
  %943 = vmatpush.bf16.msra.mxu0 0
  %944 = vmatpush.bf16.msra.mxu0 0
  %945 = vmatpush.bf16.msra.mxu0 %v941
  %946 = vmatpush.bf16.msra.mxu0 %v914
  %947 = vmatpush.bf16.msra.mxu0 %v913
  %948 = vmatpush.bf16.msra.mxu0 %v912
  %949 = vmatpush.bf16.msra.mxu0 %v911
  %950 = vmatpush.bf16.msra.mxu0 %v910
  %951 = vmatmul.bf16.gmra.mxu0 %v937
  %v952 = vpop.f32.mrf.mxu0
  %v953 = vadd.f32 %v923, %v952
  %v954 = vpop.f32.mrf.mxu0
  %v955 = vadd.f32 %v928, %v954
  %956 = vdwg.mxu0
  %vm957 = vcmask 15360
  %958 = vst.msk [vmem:[%s7] sm:$0xff] %vm957, %v953
  %vm959 = vcmask 9216
  %960 = vst.msk [vmem:[%s7 + $0x8] sm:$0x3] %vm959, %v955
  // Predicated region
  $region30: #{lenet_forward.5} parent=0 // pred_check
    _
  $region31: #{lenet_forward.5} parent=0 // pred_check_branch
    %962 = sbr.rel (0) target = $region33
  $region32: #{lenet_forward.5} parent=0 // pred_region
    _
  $region33: #{lenet_forward.5} parent=0 // pred_fallthru
    _
  // Predicated region
  $region34: #{lenet_forward.5} parent=0 // pred_check
    _
  $region35: #{lenet_forward.5} parent=0 // pred_check_branch
    %964 = sbr.rel (0) target = $region37
  $region36: #{lenet_forward.5} parent=0 // pred_region
    _
  $region37: #{lenet_forward.5} parent=0 // pred_fallthru
    _

</llo_original>
